<compile_context>
chip_gen: v6e
topology: v6e:2x2x1
jax: 0.10.0
libtpu: 0.0.40
codegen_flags: <defaults>
</compile_context>

<pallas_src>
import functools

import jax
import jax.numpy as jnp
from jax import lax
from jax.experimental import pallas as pl
from jax.experimental.pallas import tpu as pltpu

INFINITY = 1000000000000000.0


# --------------------------------------------------------------------------
# Fused kernel: QKV projection (once per batch) + per-query-tile attention.
# Ref order: x, w_qkv, b_qkv, [mask_bias], [C_prior], out, qkv_scratch
# --------------------------------------------------------------------------
def _fused_attn_kernel(*refs, n_heads, head_width, heads_per_group,
                       compute_dtype, approx_recip, has_mask, has_prior):
    x_ref, w_ref, b_ref = refs[0], refs[1], refs[2]
    pos = 3
    bias_ref = None
    cp_ref = None
    if has_mask:
        bias_ref = refs[pos]
        pos += 1
    if has_prior:
        cp_ref = refs[pos]
        pos += 1
    o_ref, qkv_ref = refs[pos], refs[pos + 1]

    H, W, G = n_heads, head_width, heads_per_group
    D = H * W
    S = x_ref.shape[1]
    tq = o_ref.shape[1]
    qi = pl.program_id(1)

    # ---- Fused Q/K/V projection: one wide MXU matmul per batch element, kept in
    #      a persistent VMEM scratch across all query tiles of that batch. ----
    @pl.when(qi == 0)
    def _():
        x = x_ref[0].astype(compute_dtype)                       # (S, D)
        w = w_ref[...]                                           # (D, 3D), compute_dtype
        qkv = jnp.dot(x, w, preferred_element_type=jnp.float32) + b_ref[...]
        qkv_ref[...] = qkv.astype(qkv_ref.dtype)                 # (S, 3D)

    q_start = pl.multiple_of(qi * tq, tq)

    # Hoisted loads / broadcasts (JAX does not CSE broadcast_in_dim; do them once).
    q_all = qkv_ref[pl.ds(q_start, tq), pl.ds(0, D)]             # (tq, D), scale pre-folded
    k_all = qkv_ref[:, pl.ds(D, D)]                              # (S, D)
    v_all = qkv_ref[:, pl.ds(2 * D, D)]                          # (S, D)

    if has_mask:
        bias = jnp.broadcast_to(bias_ref[0], (tq, S)).astype(jnp.float32)
    if has_prior:
        cp = cp_ref[0].astype(jnp.float32)                       # (tq, S)

    # ---- Heads, processed in lane-aligned groups of G heads (G*W lanes/store). ----
    for g in range(H // G):
        parts = []
        for j in range(G):
            c = (g * G + j) * W
            qh = q_all[:, c:c + W]                               # (tq, W)
            kh = k_all[:, c:c + W]                               # (S, W)
            vh = v_all[:, c:c + W]                               # (S, W)

            # q @ k^T without a transpose: contract the last dims, f32 accumulation.
            scores = lax.dot_general(
                qh, kh, dimension_numbers=(((1,), (1,)), ((), ())),
                preferred_element_type=jnp.float32)              # (tq, S)

            if has_mask:
                scores = scores + bias                           # additive -INF bias

            # Softmax over keys (f32 statistics; exp kept f32 for v5e's EUP).
            m = jnp.max(scores, axis=-1, keepdims=True)
            e = jnp.exp(scores - m)
            den = jnp.sum(e, axis=-1, keepdims=True)
            if approx_recip:
                p = e * pl.reciprocal(den, approx=True)          # EUP slot
            else:
                p = e / den

            if has_prior:
                p = p * cp                                       # multiplicative prior

            parts.append(jnp.dot(p.astype(compute_dtype), vh,
                                 preferred_element_type=jnp.float32))   # (tq, W)

        grp = parts[0] if G == 1 else jnp.concatenate(parts, axis=-1)   # (tq, G*W)
        c0 = g * G * W
        # Direct lane-dense store of this head group's context columns; this is
        # exactly the transpose(1,2).reshape(B,S,D) of the reference layout.
        o_ref[0, :, c0:c0 + G * W] = grp.astype(o_ref.dtype)


# --------------------------------------------------------------------------
# Module wrapper
# --------------------------------------------------------------------------
def bert_self_attention(x, params, n_heads, attention_mask=None, C_prior=None,
                        output_attentions=False,
                        compute_dtype=jnp.bfloat16, approx_recip=True,
                        prior_dtype=jnp.bfloat16, q_tile=256):
    B, S, D = x.shape
    H = n_heads
    W = D // H
    assert W * H == D
    out_dtype = x.dtype

    has_mask = attention_mask is not None
    has_prior = C_prior is not None

    # Head grouping so output stores are (multiples of) 128 lanes wide.
    G = max(1, min(H, 128 // W)) if W < 128 else 1
    while H % G != 0:
        G -= 1

    # Query tiling (tq must divide S and be sublane-friendly, else fall back to S).
    tq = min(S, q_tile)
    if S % tq != 0 or (tq != S and tq % 8 != 0):
        tq = S
    n_q = S // tq

    # Fold 1/sqrt(W) into Wq / bq; zero the K bias (q.bk is constant per query row
    # and cancels exactly in softmax).
    scale = 1.0 / (float(W) ** 0.5)
    w_qkv = jnp.concatenate(
        [params["wq_t"] * scale, params["wk_t"], params["wv_t"]],
        axis=1).astype(compute_dtype)                                  # (D, 3D)
    b_qkv = jnp.concatenate(
        [params["bq"] * scale, jnp.zeros_like(params["bk"]), params["bv"]],
        axis=0).reshape(1, 3 * D).astype(jnp.float32)                  # (1, 3D)

    x_in = x.astype(compute_dtype)

    args = [x_in, w_qkv, b_qkv]
    extra_specs = []
    if has_mask:
        # Additive bias (0 kept / -INF masked), computed once on (B, S).
        mask_bias = jnp.where(attention_mask == 0, -INFINITY, 0.0)
        mask_bias = mask_bias.astype(jnp.float32).reshape(B, 1, S)
        args.append(mask_bias)
        extra_specs.append(pl.BlockSpec((1, 1, S), lambda b, qi: (b, 0, 0)))
    if has_prior:
        args.append(C_prior.astype(prior_dtype))
        extra_specs.append(pl.BlockSpec((1, tq, S), lambda b, qi: (b, qi, 0)))

    kernel = functools.partial(
        _fused_attn_kernel, n_heads=H, head_width=W, heads_per_group=G,
        compute_dtype=compute_dtype, approx_recip=approx_recip,
        has_mask=has_mask, has_prior=has_prior)

    # Rough resident-set estimate -> scoped VMEM budget.
    csz = jnp.dtype(compute_dtype).itemsize
    psz = jnp.dtype(prior_dtype).itemsize
    osz = jnp.dtype(out_dtype).itemsize
    est = (2 * S * D * csz                 # x (double-buffered)
           + 2 * D * 3 * D * csz           # fused weight (worst case double-buffered)
           + 2 * 3 * D * 4                 # fused bias
           + (2 * S * 4 if has_mask else 0)
           + (2 * tq * S * psz if has_prior else 0)
           + 2 * tq * D * osz              # output tile
           + S * 3 * D * csz               # persistent QKV scratch
           + S * 3 * D * 4                 # projection f32 intermediate
           + 6 * tq * S * 4                # scores / e / p temporaries
           + 2 * tq * D * 4)
    vmem_limit = int(min(100 * 2 ** 20, max(32 * 2 ** 20, 1.3 * est)))

    def run(single_buffer_weight):
        if single_buffer_weight:
            w_spec = pl.BlockSpec((D, 3 * D), lambda b, qi: (0, 0),
                                  pipeline_mode=pl.Buffered(1))   # resident, never re-fetched
        else:
            w_spec = pl.BlockSpec((D, 3 * D), lambda b, qi: (0, 0))
        return pl.pallas_call(
            kernel,
            grid=(B, n_q),
            in_specs=[pl.BlockSpec((1, S, D), lambda b, qi: (b, 0, 0)),   # x (once per batch)
                      w_spec,                                             # fused W (resident)
                      pl.BlockSpec((1, 3 * D), lambda b, qi: (0, 0)),     # fused bias
                      ] + extra_specs,
            out_specs=pl.BlockSpec((1, tq, D), lambda b, qi: (b, qi, 0)),
            out_shape=jax.ShapeDtypeStruct((B, S, D), out_dtype),
            scratch_shapes=[pltpu.VMEM((S, 3 * D), compute_dtype)],       # persistent QKV
            compiler_params=pltpu.CompilerParams(
                dimension_semantics=("parallel", "arbitrary"),
                vmem_limit_bytes=vmem_limit),
        )(*args)

    if hasattr(pl, "Buffered"):
        try:
            hidden_states = run(True)
        except Exception:
            # Fallback if single-buffered pipeline_mode is unsupported in this jax build.
            hidden_states = run(False)
    else:
        hidden_states = run(False)

    # TODO(synk): dropout omitted (eval mode); attn probabilities not returned.
    return {"hidden_states": hidden_states, "attn_scores": None}


# --------------------------------------------------------------------------
# Pure-JAX reference (for a sanity check)
# --------------------------------------------------------------------------
def _reference(x, params, n_heads, attention_mask, C_prior):
    B, S, D = x.shape
    H, W = n_heads, D // n_heads
    q = x @ params["wq_t"] + params["bq"]
    k = x @ params["wk_t"] + params["bk"]
    v = x @ params["wv_t"] + params["bv"]
    q = q.reshape(B, S, H, W).transpose(0, 2, 1, 3)
    k = k.reshape(B, S, H, W).transpose(0, 2, 1, 3)
    v = v.reshape(B, S, H, W).transpose(0, 2, 1, 3)
    scores = jnp.einsum("bhqw,bhkw->bhqk", q, k) / jnp.sqrt(jnp.float32(W))
    scores = jnp.where(attention_mask[:, None, None, :] == 0, -INFINITY, scores)
    p = jax.nn.softmax(scores, axis=-1)
    p = p * C_prior[:, None, :, :]
    ctx = jnp.einsum("bhqk,bhkw->bhqw", p, v)
    return ctx.transpose(0, 2, 1, 3).reshape(B, S, D)


if __name__ == "__main__":
    B, S, D, H = 2, 8, 32, 4

    key = jax.random.PRNGKey(0)
    kx, kq, kk, kv, kbq, kbk, kbv, kc = jax.random.split(key, 8)

    x = jax.random.normal(kx, (B, S, D), dtype=jnp.float32)

    scale = 1.0 / jnp.sqrt(jnp.float32(D))
    params = {
        # stored pre-transposed: y = x @ wq_t + bq  ==  torch Linear
        "wq_t": jax.random.normal(kq, (D, D), dtype=jnp.float32) * scale,
        "wk_t": jax.random.normal(kk, (D, D), dtype=jnp.float32) * scale,
        "wv_t": jax.random.normal(kv, (D, D), dtype=jnp.float32) * scale,
        "bq": jax.random.normal(kbq, (D,), dtype=jnp.float32) * 0.1,
        "bk": jax.random.normal(kbk, (D,), dtype=jnp.float32) * 0.1,
        "bv": jax.random.normal(kbv, (D,), dtype=jnp.float32) * 0.1,
    }

    # attention_mask: (B, S), zero out the last two positions of batch 1
    attention_mask = jnp.ones((B, S), dtype=jnp.float32)
    attention_mask = attention_mask.at[1, -2:].set(0.0)

    # C_prior: (B, S, S) positive prior
    C_prior = jax.nn.sigmoid(jax.random.normal(kc, (B, S, S), dtype=jnp.float32))

    ref = _reference(x, params, H, attention_mask, C_prior)

    # 1) f32 path — exact numerics, tight tolerance.
    out = bert_self_attention(x, params, n_heads=H,
                              attention_mask=attention_mask, C_prior=C_prior,
                              compute_dtype=jnp.float32, approx_recip=False,
                              prior_dtype=jnp.float32)
    hidden = jax.block_until_ready(out["hidden_states"])
    assert hidden.shape == (B, S, D)
    assert jnp.allclose(hidden, ref, atol=1e-4, rtol=1e-4)

    # 2) default perf path: bf16 MXU inputs, bf16 prior stream, approx reciprocal.
    out_bf16 = bert_self_attention(x, params, n_heads=H,
                                   attention_mask=attention_mask, C_prior=C_prior)
    hidden_bf16 = jax.block_until_ready(out_bf16["hidden_states"])
    assert hidden_bf16.shape == (B, S, D)
    assert jnp.allclose(hidden_bf16, ref, atol=1e-1, rtol=1e-1)

    # 3) specialized no-mask / no-prior path (no all-ones tensors streamed).
    ones_mask = jnp.ones((B, S), dtype=jnp.float32)
    ones_prior = jnp.ones((B, S, S), dtype=jnp.float32)
    ref_plain = _reference(x, params, H, ones_mask, ones_prior)
    out_plain = bert_self_attention(x, params, n_heads=H,
                                    compute_dtype=jnp.float32, approx_recip=False,
                                    prior_dtype=jnp.float32)
    hidden_plain = jax.block_until_ready(out_plain["hidden_states"])
    assert jnp.allclose(hidden_plain, ref_plain, atol=1e-4, rtol=1e-4)

    print("KERNEL_OK")
</pallas_src>

<mosaic_0001>
module attributes {stable_mosaic.version = 11 : i64} {
  func.func @_fused_attn_kernel(%arg0: i32, %arg1: i32, %arg2: memref<1x8x32xf32, #tpu.memory_space<vmem>>, %arg3: memref<32x96xf32, #tpu.memory_space<vmem>>, %arg4: memref<1x96xf32, #tpu.memory_space<vmem>>, %arg5: memref<1x1x8xf32, #tpu.memory_space<vmem>>, %arg6: memref<1x8x8xf32, #tpu.memory_space<vmem>>, %arg7: memref<1x8x32xf32, #tpu.memory_space<vmem>>, %arg8: memref<8x96xf32, #tpu.memory_space<vmem>>) attributes {dimension_semantics = [#tpu.dimension_semantics<parallel>, #tpu.dimension_semantics<arbitrary>], iteration_bounds = array<i64: 2, 1>, scalar_prefetch = 0 : i64, scratch_operands = 1 : i64, tpu.core_type = #tpu.core_type<tc>, window_params = [{transform_indices = @transform_0, window_bounds = array<i64: 1, 8, 32>}, {pipeline_mode = #tpu.pipeline_mode<synchronous>, transform_indices = @transform_1, window_bounds = array<i64: 32, 96>}, {pipeline_mode = #tpu.pipeline_mode<synchronous>, transform_indices = @transform_2, window_bounds = array<i64: 1, 96>}, {transform_indices = @transform_3, window_bounds = array<i64: 1, 1, 8>}, {transform_indices = @transform_4, window_bounds = array<i64: 1, 8, 8>}, {transform_indices = @transform_5, window_bounds = array<i64: 1, 8, 32>}]} {
    %c0_i32 = arith.constant 0 : i32
    %0 = arith.cmpi eq, %arg1, %c0_i32 : i32
    %1 = arith.extui %0 : i1 to i32
    %c0_i32_0 = arith.constant 0 : i32
    %2 = arith.cmpi ne, %1, %c0_i32_0 : i32
    scf.if %2 {
      %c0_27 = arith.constant 0 : index
      %c0_28 = arith.constant 0 : index
      %c0_29 = arith.constant 0 : index
      %83 = vector.load %arg2[%c0_27, %c0_28, %c0_29] : memref<1x8x32xf32, #tpu.memory_space<vmem>>, vector<1x8x32xf32>
      %84 = vector.shape_cast %83 : vector<1x8x32xf32> to vector<8x32xf32>
      %c0_30 = arith.constant 0 : index
      %c0_31 = arith.constant 0 : index
      %85 = vector.load %arg3[%c0_30, %c0_31] : memref<32x96xf32, #tpu.memory_space<vmem>>, vector<32x96xf32>
      %cst_32 = arith.constant dense<0.000000e+00> : vector<8x96xf32>
      %86 = tpu.matmul %84, %85, %cst_32 {dimension_numbers = #tpu.dot_dimension_numbers<[1], [0], [0], [1], [0, 0, 1, 1], [], []>} : vector<8x32xf32>, vector<32x96xf32>, vector<8x96xf32> -> vector<8x96xf32>
      %c0_33 = arith.constant 0 : index
      %c0_34 = arith.constant 0 : index
      %87 = vector.load %arg4[%c0_33, %c0_34] : memref<1x96xf32, #tpu.memory_space<vmem>>, vector<1x96xf32>
      %88 = vector.broadcast %87 : vector<1x96xf32> to vector<8x96xf32>
      %89 = arith.addf %86, %88 : vector<8x96xf32>
      %c0_35 = arith.constant 0 : index
      %c0_36 = arith.constant 0 : index
      %90 = vector.load %arg8[%c0_35, %c0_36] : memref<8x96xf32, #tpu.memory_space<vmem>>, vector<8x96xf32>
      tpu.vector_store %arg8[%c0_35, %c0_36], %89 {strides = array<i32>} : memref<8x96xf32, #tpu.memory_space<vmem>>, vector<8x96xf32>,
    } else {
    }
    %c8_i32 = arith.constant 8 : i32
    %3 = arith.muli %arg1, %c8_i32 : i32
    %4 = tpu.assume_multiple %3, 8 : i32
    %5 = arith.index_cast %4 : i32 to index
    %c0 = arith.constant 0 : index
    %6 = vector.load %arg8[%5, %c0] : memref<8x96xf32, #tpu.memory_space<vmem>>, vector<8x32xf32>
    %c0_1 = arith.constant 0 : index
    %c32 = arith.constant 32 : index
    %7 = vector.load %arg8[%c0_1, %c32] : memref<8x96xf32, #tpu.memory_space<vmem>>, vector<8x32xf32>
    %c0_2 = arith.constant 0 : index
    %c64 = arith.constant 64 : index
    %8 = vector.load %arg8[%c0_2, %c64] : memref<8x96xf32, #tpu.memory_space<vmem>>, vector<8x32xf32>
    %c0_3 = arith.constant 0 : index
    %c0_4 = arith.constant 0 : index
    %c0_5 = arith.constant 0 : index
    %9 = vector.load %arg5[%c0_3, %c0_4, %c0_5] : memref<1x1x8xf32, #tpu.memory_space<vmem>>, vector<1x1x8xf32>
    %10 = vector.shape_cast %9 : vector<1x1x8xf32> to vector<1x8xf32>
    %11 = vector.shape_cast %10 : vector<1x8xf32> to vector<1x8xf32>
    %12 = vector.broadcast %11 : vector<1x8xf32> to vector<8x8xf32>
    %c0_6 = arith.constant 0 : index
    %c0_7 = arith.constant 0 : index
    %c0_8 = arith.constant 0 : index
    %13 = vector.load %arg6[%c0_6, %c0_7, %c0_8] : memref<1x8x8xf32, #tpu.memory_space<vmem>>, vector<1x8x8xf32>
    %14 = vector.shape_cast %13 : vector<1x8x8xf32> to vector<8x8xf32>
    %15 = vector.extract_strided_slice %6 {offsets = [0, 0], sizes = [8, 8], strides = [1, 1]} : vector<8x32xf32> to vector<8x8xf32>
    %16 = vector.extract_strided_slice %7 {offsets = [0, 0], sizes = [8, 8], strides = [1, 1]} : vector<8x32xf32> to vector<8x8xf32>
    %17 = vector.extract_strided_slice %8 {offsets = [0, 0], sizes = [8, 8], strides = [1, 1]} : vector<8x32xf32> to vector<8x8xf32>
    %cst = arith.constant dense<0.000000e+00> : vector<8x8xf32>
    %18 = tpu.matmul %15, %16, %cst {dimension_numbers = #tpu.dot_dimension_numbers<[1], [1], [0], [0], [0, 0, 1, 0], [], []>} : vector<8x8xf32>, vector<8x8xf32>, vector<8x8xf32> -> vector<8x8xf32>
    %19 = arith.addf %18, %12 : vector<8x8xf32>
    %cst_9 = arith.constant dense<0xFF800000> : vector<8xf32>
    %20 = vector.multi_reduction <maximumf>, %19, %cst_9 [1] : vector<8x8xf32> to vector<8xf32>
    %21 = vector.shape_cast %20 : vector<8xf32> to vector<8x1xf32>
    %22 = vector.broadcast %21 : vector<8x1xf32> to vector<8x8xf32>
    %23 = arith.subf %19, %22 : vector<8x8xf32>
    %24 = math.exp %23 : vector<8x8xf32>
    %cst_10 = arith.constant dense<0.000000e+00> : vector<8xf32>
    %25 = vector.multi_reduction <add>, %24, %cst_10 [1] : vector<8x8xf32> to vector<8xf32>
    %26 = vector.shape_cast %25 : vector<8xf32> to vector<8x1xf32>
    %27 = vector.broadcast %26 : vector<8x1xf32> to vector<8x8xf32>
    %28 = arith.divf %24, %27 : vector<8x8xf32>
    %29 = arith.mulf %28, %14 : vector<8x8xf32>
    %cst_11 = arith.constant dense<0.000000e+00> : vector<8x8xf32>
    %30 = tpu.matmul %29, %17, %cst_11 {dimension_numbers = #tpu.dot_dimension_numbers<[1], [0], [0], [1], [0, 0, 1, 1], [], []>} : vector<8x8xf32>, vector<8x8xf32>, vector<8x8xf32> -> vector<8x8xf32>
    %31 = vector.extract_strided_slice %6 {offsets = [0, 8], sizes = [8, 8], strides = [1, 1]} : vector<8x32xf32> to vector<8x8xf32>
    %32 = vector.extract_strided_slice %7 {offsets = [0, 8], sizes = [8, 8], strides = [1, 1]} : vector<8x32xf32> to vector<8x8xf32>
    %33 = vector.extract_strided_slice %8 {offsets = [0, 8], sizes = [8, 8], strides = [1, 1]} : vector<8x32xf32> to vector<8x8xf32>
    %cst_12 = arith.constant dense<0.000000e+00> : vector<8x8xf32>
    %34 = tpu.matmul %31, %32, %cst_12 {dimension_numbers = #tpu.dot_dimension_numbers<[1], [1], [0], [0], [0, 0, 1, 0], [], []>} : vector<8x8xf32>, vector<8x8xf32>, vector<8x8xf32> -> vector<8x8xf32>
    %35 = arith.addf %34, %12 : vector<8x8xf32>
    %cst_13 = arith.constant dense<0xFF800000> : vector<8xf32>
    %36 = vector.multi_reduction <maximumf>, %35, %cst_13 [1] : vector<8x8xf32> to vector<8xf32>
    %37 = vector.shape_cast %36 : vector<8xf32> to vector<8x1xf32>
    %38 = vector.broadcast %37 : vector<8x1xf32> to vector<8x8xf32>
    %39 = arith.subf %35, %38 : vector<8x8xf32>
    %40 = math.exp %39 : vector<8x8xf32>
    %cst_14 = arith.constant dense<0.000000e+00> : vector<8xf32>
    %41 = vector.multi_reduction <add>, %40, %cst_14 [1] : vector<8x8xf32> to vector<8xf32>
    %42 = vector.shape_cast %41 : vector<8xf32> to vector<8x1xf32>
    %43 = vector.broadcast %42 : vector<8x1xf32> to vector<8x8xf32>
    %44 = arith.divf %40, %43 : vector<8x8xf32>
    %45 = arith.mulf %44, %14 : vector<8x8xf32>
    %cst_15 = arith.constant dense<0.000000e+00> : vector<8x8xf32>
    %46 = tpu.matmul %45, %33, %cst_15 {dimension_numbers = #tpu.dot_dimension_numbers<[1], [0], [0], [1], [0, 0, 1, 1], [], []>} : vector<8x8xf32>, vector<8x8xf32>, vector<8x8xf32> -> vector<8x8xf32>
    %47 = vector.extract_strided_slice %6 {offsets = [0, 16], sizes = [8, 8], strides = [1, 1]} : vector<8x32xf32> to vector<8x8xf32>
    %48 = vector.extract_strided_slice %7 {offsets = [0, 16], sizes = [8, 8], strides = [1, 1]} : vector<8x32xf32> to vector<8x8xf32>
    %49 = vector.extract_strided_slice %8 {offsets = [0, 16], sizes = [8, 8], strides = [1, 1]} : vector<8x32xf32> to vector<8x8xf32>
    %cst_16 = arith.constant dense<0.000000e+00> : vector<8x8xf32>
    %50 = tpu.matmul %47, %48, %cst_16 {dimension_numbers = #tpu.dot_dimension_numbers<[1], [1], [0], [0], [0, 0, 1, 0], [], []>} : vector<8x8xf32>, vector<8x8xf32>, vector<8x8xf32> -> vector<8x8xf32>
    %51 = arith.addf %50, %12 : vector<8x8xf32>
    %cst_17 = arith.constant dense<0xFF800000> : vector<8xf32>
    %52 = vector.multi_reduction <maximumf>, %51, %cst_17 [1] : vector<8x8xf32> to vector<8xf32>
    %53 = vector.shape_cast %52 : vector<8xf32> to vector<8x1xf32>
    %54 = vector.broadcast %53 : vector<8x1xf32> to vector<8x8xf32>
    %55 = arith.subf %51, %54 : vector<8x8xf32>
    %56 = math.exp %55 : vector<8x8xf32>
    %cst_18 = arith.constant dense<0.000000e+00> : vector<8xf32>
    %57 = vector.multi_reduction <add>, %56, %cst_18 [1] : vector<8x8xf32> to vector<8xf32>
    %58 = vector.shape_cast %57 : vector<8xf32> to vector<8x1xf32>
    %59 = vector.broadcast %58 : vector<8x1xf32> to vector<8x8xf32>
    %60 = arith.divf %56, %59 : vector<8x8xf32>
    %61 = arith.mulf %60, %14 : vector<8x8xf32>
    %cst_19 = arith.constant dense<0.000000e+00> : vector<8x8xf32>
    %62 = tpu.matmul %61, %49, %cst_19 {dimension_numbers = #tpu.dot_dimension_numbers<[1], [0], [0], [1], [0, 0, 1, 1], [], []>} : vector<8x8xf32>, vector<8x8xf32>, vector<8x8xf32> -> vector<8x8xf32>
    %63 = vector.extract_strided_slice %6 {offsets = [0, 24], sizes = [8, 8], strides = [1, 1]} : vector<8x32xf32> to vector<8x8xf32>
    %64 = vector.extract_strided_slice %7 {offsets = [0, 24], sizes = [8, 8], strides = [1, 1]} : vector<8x32xf32> to vector<8x8xf32>
    %65 = vector.extract_strided_slice %8 {offsets = [0, 24], sizes = [8, 8], strides = [1, 1]} : vector<8x32xf32> to vector<8x8xf32>
    %cst_20 = arith.constant dense<0.000000e+00> : vector<8x8xf32>
    %66 = tpu.matmul %63, %64, %cst_20 {dimension_numbers = #tpu.dot_dimension_numbers<[1], [1], [0], [0], [0, 0, 1, 0], [], []>} : vector<8x8xf32>, vector<8x8xf32>, vector<8x8xf32> -> vector<8x8xf32>
    %67 = arith.addf %66, %12 : vector<8x8xf32>
    %cst_21 = arith.constant dense<0xFF800000> : vector<8xf32>
    %68 = vector.multi_reduction <maximumf>, %67, %cst_21 [1] : vector<8x8xf32> to vector<8xf32>
    %69 = vector.shape_cast %68 : vector<8xf32> to vector<8x1xf32>
    %70 = vector.broadcast %69 : vector<8x1xf32> to vector<8x8xf32>
    %71 = arith.subf %67, %70 : vector<8x8xf32>
    %72 = math.exp %71 : vector<8x8xf32>
    %cst_22 = arith.constant dense<0.000000e+00> : vector<8xf32>
    %73 = vector.multi_reduction <add>, %72, %cst_22 [1] : vector<8x8xf32> to vector<8xf32>
    %74 = vector.shape_cast %73 : vector<8xf32> to vector<8x1xf32>
    %75 = vector.broadcast %74 : vector<8x1xf32> to vector<8x8xf32>
    %76 = arith.divf %72, %75 : vector<8x8xf32>
    %77 = arith.mulf %76, %14 : vector<8x8xf32>
    %cst_23 = arith.constant dense<0.000000e+00> : vector<8x8xf32>
    %78 = tpu.matmul %77, %65, %cst_23 {dimension_numbers = #tpu.dot_dimension_numbers<[1], [0], [0], [1], [0, 0, 1, 1], [], []>} : vector<8x8xf32>, vector<8x8xf32>, vector<8x8xf32> -> vector<8x8xf32>
    %79 = tpu.concatenate %30, %46, %62, %78 in 1 : vector<8x8xf32>, vector<8x8xf32>, vector<8x8xf32>, vector<8x8xf32> -> vector<8x32xf32>
    %c0_24 = arith.constant 0 : index
    %c0_25 = arith.constant 0 : index
    %c0_26 = arith.constant 0 : index
    %80 = vector.load %arg7[%c0_24, %c0_25, %c0_26] : memref<1x8x32xf32, #tpu.memory_space<vmem>>, vector<1x8x32xf32>
    %81 = vector.shape_cast %80 : vector<1x8x32xf32> to vector<8x32xf32>
    %82 = vector.shape_cast %79 : vector<8x32xf32> to vector<1x8x32xf32>
    tpu.vector_store %arg7[%c0_24, %c0_25, %c0_26], %82 {strides = array<i32>} : memref<1x8x32xf32, #tpu.memory_space<vmem>>, vector<1x8x32xf32>,
    return
  }
  func.func @transform_0(%arg0: i32, %arg1: i32) -> (i32, i32, i32) {
    %c0_i32 = arith.constant 0 : i32
    %c0_i32_0 = arith.constant 0 : i32
    %c0_i32_1 = arith.constant 0 : i32
    return %arg0, %c0_i32, %c0_i32_0 : i32, i32, i32
  }
  func.func @transform_1(%arg0: i32, %arg1: i32) -> (i32, i32) {
    %c0_i32 = arith.constant 0 : i32
    %c0_i32_0 = arith.constant 0 : i32
    %c0_i32_1 = arith.constant 0 : i32
    return %c0_i32, %c0_i32_0 : i32, i32
  }
  func.func @transform_2(%arg0: i32, %arg1: i32) -> (i32, i32) {
    %c0_i32 = arith.constant 0 : i32
    %c0_i32_0 = arith.constant 0 : i32
    %c0_i32_1 = arith.constant 0 : i32
    return %c0_i32, %c0_i32_0 : i32, i32
  }
  func.func @transform_3(%arg0: i32, %arg1: i32) -> (i32, i32, i32) {
    %c0_i32 = arith.constant 0 : i32
    %c0_i32_0 = arith.constant 0 : i32
    %c0_i32_1 = arith.constant 0 : i32
    return %arg0, %c0_i32, %c0_i32_0 : i32, i32, i32
  }
  func.func @transform_4(%arg0: i32, %arg1: i32) -> (i32, i32, i32) {
    %c0_i32 = arith.constant 0 : i32
    %c0_i32_0 = arith.constant 0 : i32
    return %arg0, %arg1, %c0_i32 : i32, i32, i32
  }
  func.func @transform_5(%arg0: i32, %arg1: i32) -> (i32, i32, i32) {
    %c0_i32 = arith.constant 0 : i32
    %c0_i32_0 = arith.constant 0 : i32
    return %arg0, %arg1, %c0_i32 : i32, i32, i32
  }
}

module attributes {stable_mosaic.version = 11 : i64} {
  func.func @_fused_attn_kernel(%arg0: i32, %arg1: i32, %arg2: memref<1x8x32xf32, #tpu.memory_space<vmem>>, %arg3: memref<32x96xf32, #tpu.memory_space<vmem>>, %arg4: memref<1x96xf32, #tpu.memory_space<vmem>>, %arg5: memref<1x1x8xf32, #tpu.memory_space<vmem>>, %arg6: memref<1x8x8xf32, #tpu.memory_space<vmem>>, %arg7: memref<1x8x32xf32, #tpu.memory_space<vmem>>, %arg8: memref<8x96xf32, #tpu.memory_space<vmem>>) attributes {dimension_semantics = [#tpu.dimension_semantics<parallel>, #tpu.dimension_semantics<arbitrary>], iteration_bounds = array<i64: 2, 1>, scalar_prefetch = 0 : i64, scratch_operands = 1 : i64, tpu.core_type = #tpu.core_type<tc>, window_params = [{transform_indices = @transform_0, window_bounds = array<i64: 1, 8, 32>}, {pipeline_mode = #tpu.pipeline_mode<synchronous>, transform_indices = @transform_1, window_bounds = array<i64: 32, 96>}, {pipeline_mode = #tpu.pipeline_mode<synchronous>, transform_indices = @transform_2, window_bounds = array<i64: 1, 96>}, {transform_indices = @transform_3, window_bounds = array<i64: 1, 1, 8>}, {transform_indices = @transform_4, window_bounds = array<i64: 1, 8, 8>}, {transform_indices = @transform_5, window_bounds = array<i64: 1, 8, 32>}]} {
    %c0_i32 = arith.constant 0 : i32
    %0 = arith.cmpi eq, %arg1, %c0_i32 : i32
    %1 = arith.extui %0 : i1 to i32
    %c0_i32_0 = arith.constant 0 : i32
    %2 = arith.cmpi ne, %1, %c0_i32_0 : i32
    scf.if %2 {
      %c0_27 = arith.constant 0 : index
      %c0_28 = arith.constant 0 : index
      %c0_29 = arith.constant 0 : index
      %83 = vector.load %arg2[%c0_27, %c0_28, %c0_29] : memref<1x8x32xf32, #tpu.memory_space<vmem>>, vector<1x8x32xf32>
      %84 = vector.shape_cast %83 : vector<1x8x32xf32> to vector<8x32xf32>
      %c0_30 = arith.constant 0 : index
      %c0_31 = arith.constant 0 : index
      %85 = vector.load %arg3[%c0_30, %c0_31] : memref<32x96xf32, #tpu.memory_space<vmem>>, vector<32x96xf32>
      %cst_32 = arith.constant dense<0.000000e+00> : vector<8x96xf32>
      %86 = tpu.matmul %84, %85, %cst_32 {dimension_numbers = #tpu.dot_dimension_numbers<[1], [0], [0], [1], [0, 0, 1, 1], [], []>} : vector<8x32xf32>, vector<32x96xf32>, vector<8x96xf32> -> vector<8x96xf32>
      %c0_33 = arith.constant 0 : index
      %c0_34 = arith.constant 0 : index
      %87 = vector.load %arg4[%c0_33, %c0_34] : memref<1x96xf32, #tpu.memory_space<vmem>>, vector<1x96xf32>
      %88 = vector.broadcast %87 : vector<1x96xf32> to vector<8x96xf32>
      %89 = arith.addf %86, %88 : vector<8x96xf32>
      %c0_35 = arith.constant 0 : index
      %c0_36 = arith.constant 0 : index
      %90 = vector.load %arg8[%c0_35, %c0_36] : memref<8x96xf32, #tpu.memory_space<vmem>>, vector<8x96xf32>
      tpu.vector_store %arg8[%c0_35, %c0_36], %89 {strides = array<i32>} : memref<8x96xf32, #tpu.memory_space<vmem>>, vector<8x96xf32>,
    } else {
    }
    %c8_i32 = arith.constant 8 : i32
    %3 = arith.muli %arg1, %c8_i32 : i32
    %4 = tpu.assume_multiple %3, 8 : i32
    %5 = arith.index_cast %4 : i32 to index
    %c0 = arith.constant 0 : index
    %6 = vector.load %arg8[%5, %c0] : memref<8x96xf32, #tpu.memory_space<vmem>>, vector<8x32xf32>
    %c0_1 = arith.constant 0 : index
    %c32 = arith.constant 32 : index
    %7 = vector.load %arg8[%c0_1, %c32] : memref<8x96xf32, #tpu.memory_space<vmem>>, vector<8x32xf32>
    %c0_2 = arith.constant 0 : index
    %c64 = arith.constant 64 : index
    %8 = vector.load %arg8[%c0_2, %c64] : memref<8x96xf32, #tpu.memory_space<vmem>>, vector<8x32xf32>
    %c0_3 = arith.constant 0 : index
    %c0_4 = arith.constant 0 : index
    %c0_5 = arith.constant 0 : index
    %9 = vector.load %arg5[%c0_3, %c0_4, %c0_5] : memref<1x1x8xf32, #tpu.memory_space<vmem>>, vector<1x1x8xf32>
    %10 = vector.shape_cast %9 : vector<1x1x8xf32> to vector<1x8xf32>
    %11 = vector.shape_cast %10 : vector<1x8xf32> to vector<1x8xf32>
    %12 = vector.broadcast %11 : vector<1x8xf32> to vector<8x8xf32>
    %c0_6 = arith.constant 0 : index
    %c0_7 = arith.constant 0 : index
    %c0_8 = arith.constant 0 : index
    %13 = vector.load %arg6[%c0_6, %c0_7, %c0_8] : memref<1x8x8xf32, #tpu.memory_space<vmem>>, vector<1x8x8xf32>
    %14 = vector.shape_cast %13 : vector<1x8x8xf32> to vector<8x8xf32>
    %15 = vector.extract_strided_slice %6 {offsets = [0, 0], sizes = [8, 8], strides = [1, 1]} : vector<8x32xf32> to vector<8x8xf32>
    %16 = vector.extract_strided_slice %7 {offsets = [0, 0], sizes = [8, 8], strides = [1, 1]} : vector<8x32xf32> to vector<8x8xf32>
    %17 = vector.extract_strided_slice %8 {offsets = [0, 0], sizes = [8, 8], strides = [1, 1]} : vector<8x32xf32> to vector<8x8xf32>
    %cst = arith.constant dense<0.000000e+00> : vector<8x8xf32>
    %18 = tpu.matmul %15, %16, %cst {dimension_numbers = #tpu.dot_dimension_numbers<[1], [1], [0], [0], [0, 0, 1, 0], [], []>} : vector<8x8xf32>, vector<8x8xf32>, vector<8x8xf32> -> vector<8x8xf32>
    %19 = arith.addf %18, %12 : vector<8x8xf32>
    %cst_9 = arith.constant dense<0xFF800000> : vector<8xf32>
    %20 = vector.multi_reduction <maximumf>, %19, %cst_9 [1] : vector<8x8xf32> to vector<8xf32>
    %21 = vector.shape_cast %20 : vector<8xf32> to vector<8x1xf32>
    %22 = vector.broadcast %21 : vector<8x1xf32> to vector<8x8xf32>
    %23 = arith.subf %19, %22 : vector<8x8xf32>
    %24 = math.exp %23 : vector<8x8xf32>
    %cst_10 = arith.constant dense<0.000000e+00> : vector<8xf32>
    %25 = vector.multi_reduction <add>, %24, %cst_10 [1] : vector<8x8xf32> to vector<8xf32>
    %26 = vector.shape_cast %25 : vector<8xf32> to vector<8x1xf32>
    %27 = vector.broadcast %26 : vector<8x1xf32> to vector<8x8xf32>
    %28 = arith.divf %24, %27 : vector<8x8xf32>
    %29 = arith.mulf %28, %14 : vector<8x8xf32>
    %cst_11 = arith.constant dense<0.000000e+00> : vector<8x8xf32>
    %30 = tpu.matmul %29, %17, %cst_11 {dimension_numbers = #tpu.dot_dimension_numbers<[1], [0], [0], [1], [0, 0, 1, 1], [], []>} : vector<8x8xf32>, vector<8x8xf32>, vector<8x8xf32> -> vector<8x8xf32>
    %31 = vector.extract_strided_slice %6 {offsets = [0, 8], sizes = [8, 8], strides = [1, 1]} : vector<8x32xf32> to vector<8x8xf32>
    %32 = vector.extract_strided_slice %7 {offsets = [0, 8], sizes = [8, 8], strides = [1, 1]} : vector<8x32xf32> to vector<8x8xf32>
    %33 = vector.extract_strided_slice %8 {offsets = [0, 8], sizes = [8, 8], strides = [1, 1]} : vector<8x32xf32> to vector<8x8xf32>
    %cst_12 = arith.constant dense<0.000000e+00> : vector<8x8xf32>
    %34 = tpu.matmul %31, %32, %cst_12 {dimension_numbers = #tpu.dot_dimension_numbers<[1], [1], [0], [0], [0, 0, 1, 0], [], []>} : vector<8x8xf32>, vector<8x8xf32>, vector<8x8xf32> -> vector<8x8xf32>
    %35 = arith.addf %34, %12 : vector<8x8xf32>
    %cst_13 = arith.constant dense<0xFF800000> : vector<8xf32>
    %36 = vector.multi_reduction <maximumf>, %35, %cst_13 [1] : vector<8x8xf32> to vector<8xf32>
    %37 = vector.shape_cast %36 : vector<8xf32> to vector<8x1xf32>
    %38 = vector.broadcast %37 : vector<8x1xf32> to vector<8x8xf32>
    %39 = arith.subf %35, %38 : vector<8x8xf32>
    %40 = math.exp %39 : vector<8x8xf32>
    %cst_14 = arith.constant dense<0.000000e+00> : vector<8xf32>
    %41 = vector.multi_reduction <add>, %40, %cst_14 [1] : vector<8x8xf32> to vector<8xf32>
    %42 = vector.shape_cast %41 : vector<8xf32> to vector<8x1xf32>
    %43 = vector.broadcast %42 : vector<8x1xf32> to vector<8x8xf32>
    %44 = arith.divf %40, %43 : vector<8x8xf32>
    %45 = arith.mulf %44, %14 : vector<8x8xf32>
    %cst_15 = arith.constant dense<0.000000e+00> : vector<8x8xf32>
    %46 = tpu.matmul %45, %33, %cst_15 {dimension_numbers = #tpu.dot_dimension_numbers<[1], [0], [0], [1], [0, 0, 1, 1], [], []>} : vector<8x8xf32>, vector<8x8xf32>, vector<8x8xf32> -> vector<8x8xf32>
    %47 = vector.extract_strided_slice %6 {offsets = [0, 16], sizes = [8, 8], strides = [1, 1]} : vector<8x32xf32> to vector<8x8xf32>
    %48 = vector.extract_strided_slice %7 {offsets = [0, 16], sizes = [8, 8], strides = [1, 1]} : vector<8x32xf32> to vector<8x8xf32>
    %49 = vector.extract_strided_slice %8 {offsets = [0, 16], sizes = [8, 8], strides = [1, 1]} : vector<8x32xf32> to vector<8x8xf32>
    %cst_16 = arith.constant dense<0.000000e+00> : vector<8x8xf32>
    %50 = tpu.matmul %47, %48, %cst_16 {dimension_numbers = #tpu.dot_dimension_numbers<[1], [1], [0], [0], [0, 0, 1, 0], [], []>} : vector<8x8xf32>, vector<8x8xf32>, vector<8x8xf32> -> vector<8x8xf32>
    %51 = arith.addf %50, %12 : vector<8x8xf32>
    %cst_17 = arith.constant dense<0xFF800000> : vector<8xf32>
    %52 = vector.multi_reduction <maximumf>, %51, %cst_17 [1] : vector<8x8xf32> to vector<8xf32>
    %53 = vector.shape_cast %52 : vector<8xf32> to vector<8x1xf32>
    %54 = vector.broadcast %53 : vector<8x1xf32> to vector<8x8xf32>
    %55 = arith.subf %51, %54 : vector<8x8xf32>
    %56 = math.exp %55 : vector<8x8xf32>
    %cst_18 = arith.constant dense<0.000000e+00> : vector<8xf32>
    %57 = vector.multi_reduction <add>, %56, %cst_18 [1] : vector<8x8xf32> to vector<8xf32>
    %58 = vector.shape_cast %57 : vector<8xf32> to vector<8x1xf32>
    %59 = vector.broadcast %58 : vector<8x1xf32> to vector<8x8xf32>
    %60 = arith.divf %56, %59 : vector<8x8xf32>
    %61 = arith.mulf %60, %14 : vector<8x8xf32>
    %cst_19 = arith.constant dense<0.000000e+00> : vector<8x8xf32>
    %62 = tpu.matmul %61, %49, %cst_19 {dimension_numbers = #tpu.dot_dimension_numbers<[1], [0], [0], [1], [0, 0, 1, 1], [], []>} : vector<8x8xf32>, vector<8x8xf32>, vector<8x8xf32> -> vector<8x8xf32>
    %63 = vector.extract_strided_slice %6 {offsets = [0, 24], sizes = [8, 8], strides = [1, 1]} : vector<8x32xf32> to vector<8x8xf32>
    %64 = vector.extract_strided_slice %7 {offsets = [0, 24], sizes = [8, 8], strides = [1, 1]} : vector<8x32xf32> to vector<8x8xf32>
    %65 = vector.extract_strided_slice %8 {offsets = [0, 24], sizes = [8, 8], strides = [1, 1]} : vector<8x32xf32> to vector<8x8xf32>
    %cst_20 = arith.constant dense<0.000000e+00> : vector<8x8xf32>
    %66 = tpu.matmul %63, %64, %cst_20 {dimension_numbers = #tpu.dot_dimension_numbers<[1], [1], [0], [0], [0, 0, 1, 0], [], []>} : vector<8x8xf32>, vector<8x8xf32>, vector<8x8xf32> -> vector<8x8xf32>
    %67 = arith.addf %66, %12 : vector<8x8xf32>
    %cst_21 = arith.constant dense<0xFF800000> : vector<8xf32>
    %68 = vector.multi_reduction <maximumf>, %67, %cst_21 [1] : vector<8x8xf32> to vector<8xf32>
    %69 = vector.shape_cast %68 : vector<8xf32> to vector<8x1xf32>
    %70 = vector.broadcast %69 : vector<8x1xf32> to vector<8x8xf32>
    %71 = arith.subf %67, %70 : vector<8x8xf32>
    %72 = math.exp %71 : vector<8x8xf32>
    %cst_22 = arith.constant dense<0.000000e+00> : vector<8xf32>
    %73 = vector.multi_reduction <add>, %72, %cst_22 [1] : vector<8x8xf32> to vector<8xf32>
    %74 = vector.shape_cast %73 : vector<8xf32> to vector<8x1xf32>
    %75 = vector.broadcast %74 : vector<8x1xf32> to vector<8x8xf32>
    %76 = arith.divf %72, %75 : vector<8x8xf32>
    %77 = arith.mulf %76, %14 : vector<8x8xf32>
    %cst_23 = arith.constant dense<0.000000e+00> : vector<8x8xf32>
    %78 = tpu.matmul %77, %65, %cst_23 {dimension_numbers = #tpu.dot_dimension_numbers<[1], [0], [0], [1], [0, 0, 1, 1], [], []>} : vector<8x8xf32>, vector<8x8xf32>, vector<8x8xf32> -> vector<8x8xf32>
    %79 = tpu.concatenate %30, %46, %62, %78 in 1 : vector<8x8xf32>, vector<8x8xf32>, vector<8x8xf32>, vector<8x8xf32> -> vector<8x32xf32>
    %c0_24 = arith.constant 0 : index
    %c0_25 = arith.constant 0 : index
    %c0_26 = arith.constant 0 : index
    %80 = vector.load %arg7[%c0_24, %c0_25, %c0_26] : memref<1x8x32xf32, #tpu.memory_space<vmem>>, vector<1x8x32xf32>
    %81 = vector.shape_cast %80 : vector<1x8x32xf32> to vector<8x32xf32>
    %82 = vector.shape_cast %79 : vector<8x32xf32> to vector<1x8x32xf32>
    tpu.vector_store %arg7[%c0_24, %c0_25, %c0_26], %82 {strides = array<i32>} : memref<1x8x32xf32, #tpu.memory_space<vmem>>, vector<1x8x32xf32>,
    return
  }
  func.func @transform_0(%arg0: i32, %arg1: i32) -> (i32, i32, i32) {
    %c0_i32 = arith.constant 0 : i32
    %c0_i32_0 = arith.constant 0 : i32
    %c0_i32_1 = arith.constant 0 : i32
    return %arg0, %c0_i32, %c0_i32_0 : i32, i32, i32
  }
  func.func @transform_1(%arg0: i32, %arg1: i32) -> (i32, i32) {
    %c0_i32 = arith.constant 0 : i32
    %c0_i32_0 = arith.constant 0 : i32
    %c0_i32_1 = arith.constant 0 : i32
    return %c0_i32, %c0_i32_0 : i32, i32
  }
  func.func @transform_2(%arg0: i32, %arg1: i32) -> (i32, i32) {
    %c0_i32 = arith.constant 0 : i32
    %c0_i32_0 = arith.constant 0 : i32
    %c0_i32_1 = arith.constant 0 : i32
    return %c0_i32, %c0_i32_0 : i32, i32
  }
  func.func @transform_3(%arg0: i32, %arg1: i32) -> (i32, i32, i32) {
    %c0_i32 = arith.constant 0 : i32
    %c0_i32_0 = arith.constant 0 : i32
    %c0_i32_1 = arith.constant 0 : i32
    return %arg0, %c0_i32, %c0_i32_0 : i32, i32, i32
  }
  func.func @transform_4(%arg0: i32, %arg1: i32) -> (i32, i32, i32) {
    %c0_i32 = arith.constant 0 : i32
    %c0_i32_0 = arith.constant 0 : i32
    return %arg0, %arg1, %c0_i32 : i32, i32, i32
  }
  func.func @transform_5(%arg0: i32, %arg1: i32) -> (i32, i32, i32) {
    %c0_i32 = arith.constant 0 : i32
    %c0_i32_0 = arith.constant 0 : i32
    return %arg0, %arg1, %c0_i32 : i32, i32, i32
  }
}

</mosaic_0001>

<llo_original>
// kernel: tpu_custom_call.1
$region0: #{tpu_custom_call.1}
  #allocation0 [shape = 'u32[]', space=smem, size = 0x4, offset = 0x4, fixed_abs, tag = 'smem constant byte address 0x4 - core index']
  #allocation1 [shape = 'u32[144,128]{1,0:T(1,128)}', space=vmem, size = 0x12000, scoped, tag = 'internal scratch']
  #allocation2 [shape = 'f32[8,96]{1,0:T(8,128)}', space=vmem, size = 0x1000, scoped, tag = 'scratch operand']
  %s0 = inlined_call_operand.hbm [shape: f32[2,8,32], index: 0, kind: input, shape index: {}]
  %s1 = inlined_call_operand.hbm [shape: f32[32,96], index: 1, kind: input, shape index: {}]
  %s2 = inlined_call_operand.vmem [shape: f32[1,96], index: 2, kind: input, shape index: {}]
  %s3 = inlined_call_operand.vmem [shape: f32[2,1,8], index: 3, kind: input, shape index: {}]
  %s4 = inlined_call_operand.hbm [shape: f32[2,8,8], index: 4, kind: input, shape index: {}]
  %s5 = inlined_call_operand.hbm [shape: f32[2,8,32], index: 5, kind: output, shape index: {}]
  %s6 = sld [smem:[#allocation0]]
  $region69: #{tpu_custom_call.1} parent=0
    _
  %s8 = ssub.s32 1, %s6
  %s9 = scalar_select 0, %s8, %s6
  $region1: #{tpu_custom_call.1} parent=0
    #allocation3 [shape = 'u8[8192]{0}', space=vmem, size = 0x2000, scoped, tag = 'input window, operand 0']
    #allocation4 [shape = 's32[2]{0}', space=sflag, size = 0x8, scoped, tag = 'scoped memory for tpu_custom_call.1']
    #allocation5 [shape = 's32[2]{0}', space=sflag, size = 0x8, scoped, tag = 'scoped memory for tpu_custom_call.1']
    #allocation6 [shape = 'u8[16384]{0}', space=vmem, size = 0x4000, scoped, tag = 'input window, operand 1, single buffered']
    #allocation7 [shape = 's32[1]{0}', space=sflag, size = 0x4, scoped, tag = 'scoped memory for tpu_custom_call.1']
    #allocation8 [shape = 'u8[8192]{0}', space=vmem, size = 0x2000, scoped, tag = 'input window, operand 4']
    #allocation9 [shape = 'u8[8192]{0}', space=vmem, size = 0x2000, scoped, tag = 'output window, operand 0']
    %10 = vsyncpa [#allocation4], 0
    %s11 = scalar_lea.sflag [#allocation4], 1
    %12 = vsyncpa %s11, 0
    %13 = vsyncpa [#allocation7], 0
    %14 = vsyncpa [#allocation5], 0
    %s15 = scalar_lea.sflag [#allocation5], 1
    %16 = vsyncpa %s15, 0
    loop: start=0, step=1, limit=4
    $region2: #{tpu_custom_call.1} parent=1 // loop_pre_header
      _
    $region3: #{tpu_custom_call.1} parent=1 // loop_header
      %s18 = sphi 0, %s22
      %p19 = scmp.ge.s32.totalorder %s18, 4
      %s25 = sphi 0, %s37
      %s26 = sphi 0, %s33
      %s27 = sphi 0, %s25
      %s28 = sphi 0, %s26
      %s29 = sphi 0, %s27
      %s30 = sphi 0, %s28
      %s40 = sphi 0, %s42
      %s43 = sphi 0, %s40
      %s44 = sphi 0, %s43
      %s60 = sphi 0, %s44
      %s64 = sphi 0, %s64
      %s66 = sphi 0, %s64
      %s67 = sphi 0, %s66
      %s81 = sphi 0, %s67
      %s85 = sphi 0, %s85
      %s87 = sphi 0, %s85
      %s88 = sphi 0, %s87
      %s102 = sphi 0, %s88
      %s108 = sphi 0, %s110
      %s111 = sphi 0, %s108
      %s112 = sphi 0, %s111
      %s128 = sphi 0, %s112
      %s136 = sphi 0, %s138
      %s139 = sphi 0, %s136
      %s140 = sphi 0, %s139
      %s156 = sphi 0, %s140
      %s164 = sphi 0, %s166
      %s167 = sphi 0, %s164
      %s168 = sphi 0, %s167
      %s184 = sphi 0, %s168
    $region4: #{tpu_custom_call.1} parent=1 // loop_header_branch
      %21 = sbr.rel (%p19) target = $region8
    $region5: #{tpu_custom_call.1} parent=1 // loop_body
      %s23 = ssub.s32 %s18, 1
      %s24 = ssub.s32 %s18, 2
      %s31 = sadd.s32 1, %s26
      %p32 = scmp.ge.s32.totalorder %s31, 1
      %s33 = scalar_select %p32, 0, %s31
      %s34 = sadd.s32 1, %s25
      %s35 = scalar_select %p32, %s34, %s25
      %p36 = scmp.ge.s32.totalorder %s35, 2
      %s37 = scalar_select %p36, 0, %s35
      %s38 = ssub.s32 %s25, %s37
      %p39 = scmp.eq.s32.totalorder %s38, 0
      %s41 = sadd.s32 %s40, 1
      %s42 = scalar_select %p39, %s40, %s41
      %p45 = pneg %p39
      %p46 = scmp.eq.s32.totalorder %s18, 1
      %p47 = por %p45, %p46
      %p48 = scmp.ne.s32.totalorder %s40, %s43
      %p49 = scmp.eq.s32.totalorder %s18, 0
      %p50 = por %p48, %p49
      %p51 = scmp.ne.s32.totalorder %s40, %s43
      %p52 = scmp.eq.s32.totalorder %s23, 1
      %p53 = por %p51, %p52
      %p54 = scmp.ne.s32.totalorder %s43, %s44
      %p55 = scmp.eq.s32.totalorder %s23, 0
      %p56 = por %p54, %p55
      %p57 = scmp.ne.s32.totalorder %s43, %s44
      %p58 = scmp.eq.s32.totalorder %s24, 1
      %p59 = por %p57, %p58
      %p61 = scmp.ne.s32.totalorder %s44, %s60
      %p62 = scmp.eq.s32.totalorder %s24, 0
      %p63 = por %p61, %p62
      %s65 = sadd.s32 %s64, 1
      %p68 = scmp.eq.s32.totalorder %s18, 1
      %p69 = scmp.ne.s32.totalorder %s64, %s66
      %p70 = scmp.eq.s32.totalorder %s18, 0
      %p71 = por %p69, %p70
      %p72 = scmp.ne.s32.totalorder %s64, %s66
      %p73 = scmp.eq.s32.totalorder %s23, 1
      %p74 = por %p72, %p73
      %p75 = scmp.ne.s32.totalorder %s66, %s67
      %p76 = scmp.eq.s32.totalorder %s23, 0
      %p77 = por %p75, %p76
      %p78 = scmp.ne.s32.totalorder %s66, %s67
      %p79 = scmp.eq.s32.totalorder %s24, 1
      %p80 = por %p78, %p79
      %p82 = scmp.ne.s32.totalorder %s67, %s81
      %p83 = scmp.eq.s32.totalorder %s24, 0
      %p84 = por %p82, %p83
      %s86 = sadd.s32 %s85, 1
      %p89 = scmp.eq.s32.totalorder %s18, 1
      %p90 = scmp.ne.s32.totalorder %s85, %s87
      %p91 = scmp.eq.s32.totalorder %s18, 0
      %p92 = por %p90, %p91
      %p93 = scmp.ne.s32.totalorder %s85, %s87
      %p94 = scmp.eq.s32.totalorder %s23, 1
      %p95 = por %p93, %p94
      %p96 = scmp.ne.s32.totalorder %s87, %s88
      %p97 = scmp.eq.s32.totalorder %s23, 0
      %p98 = por %p96, %p97
      %p99 = scmp.ne.s32.totalorder %s87, %s88
      %p100 = scmp.eq.s32.totalorder %s24, 1
      %p101 = por %p99, %p100
      %p103 = scmp.ne.s32.totalorder %s88, %s102
      %p104 = scmp.eq.s32.totalorder %s24, 0
      %p105 = por %p103, %p104
      %s106 = ssub.s32 %s25, %s37
      %p107 = scmp.eq.s32.totalorder %s106, 0
      %s109 = sadd.s32 %s108, 1
      %s110 = scalar_select %p107, %s108, %s109
      %p113 = pneg %p107
      %p114 = scmp.eq.s32.totalorder %s18, 1
      %p115 = por %p113, %p114
      %p116 = scmp.ne.s32.totalorder %s108, %s111
      %p117 = scmp.eq.s32.totalorder %s18, 0
      %p118 = por %p116, %p117
      %p119 = scmp.ne.s32.totalorder %s108, %s111
      %p120 = scmp.eq.s32.totalorder %s23, 1
      %p121 = por %p119, %p120
      %p122 = scmp.ne.s32.totalorder %s111, %s112
      %p123 = scmp.eq.s32.totalorder %s23, 0
      %p124 = por %p122, %p123
      %p125 = scmp.ne.s32.totalorder %s111, %s112
      %p126 = scmp.eq.s32.totalorder %s24, 1
      %p127 = por %p125, %p126
      %p129 = scmp.ne.s32.totalorder %s112, %s128
      %p130 = scmp.eq.s32.totalorder %s24, 0
      %p131 = por %p129, %p130
      %s132 = ssub.s32 %s25, %s37
      %s133 = ssub.s32 %s26, %s33
      %s134 = sor.u32 %s132, %s133
      %p135 = scmp.eq.s32.totalorder %s134, 0
      %s137 = sadd.s32 %s136, 1
      %s138 = scalar_select %p135, %s136, %s137
      %p141 = pneg %p135
      %p142 = scmp.eq.s32.totalorder %s18, 1
      %p143 = por %p141, %p142
      %p144 = scmp.ne.s32.totalorder %s136, %s139
      %p145 = scmp.eq.s32.totalorder %s18, 0
      %p146 = por %p144, %p145
      %p147 = scmp.ne.s32.totalorder %s136, %s139
      %p148 = scmp.eq.s32.totalorder %s23, 1
      %p149 = por %p147, %p148
      %p150 = scmp.ne.s32.totalorder %s139, %s140
      %p151 = scmp.eq.s32.totalorder %s23, 0
      %p152 = por %p150, %p151
      %p153 = scmp.ne.s32.totalorder %s139, %s140
      %p154 = scmp.eq.s32.totalorder %s24, 1
      %p155 = por %p153, %p154
      %p157 = scmp.ne.s32.totalorder %s140, %s156
      %p158 = scmp.eq.s32.totalorder %s24, 0
      %p159 = por %p157, %p158
      %s160 = ssub.s32 %s25, %s37
      %s161 = ssub.s32 %s26, %s33
      %s162 = sor.u32 %s160, %s161
      %p163 = scmp.eq.s32.totalorder %s162, 0
      %s165 = sadd.s32 %s164, 1
      %s166 = scalar_select %p163, %s164, %s165
      %p169 = pneg %p163
      %p170 = scmp.eq.s32.totalorder %s18, 1
      %p171 = por %p169, %p170
      %p172 = scmp.ne.s32.totalorder %s164, %s167
      %p173 = scmp.eq.s32.totalorder %s18, 0
      %p174 = por %p172, %p173
      %p175 = scmp.ne.s32.totalorder %s164, %s167
      %p176 = scmp.eq.s32.totalorder %s23, 1
      %p177 = por %p175, %p176
      %p178 = scmp.ne.s32.totalorder %s167, %s168
      %p179 = scmp.eq.s32.totalorder %s23, 0
      %p180 = por %p178, %p179
      %p181 = scmp.ne.s32.totalorder %s167, %s168
      %p182 = scmp.eq.s32.totalorder %s24, 1
      %p183 = por %p181, %p182
      %p185 = scmp.ne.s32.totalorder %s168, %s184
      %p186 = scmp.eq.s32.totalorder %s24, 0
      %p187 = por %p185, %p186
      %p188 = scmp.le.s32.totalorder 1, %s18
      %p189 = scmp.lt.s32.totalorder %s18, 3
      %p190 = pnand %p188, %p189
      %p191 = pneg %p190
      // Predicated region
      $region9: #{tpu_custom_call.1} parent=5 // pred_check
        _
      $region10: #{tpu_custom_call.1} parent=5 // pred_check_branch
        %193 = sbr.rel (%p190) target = $region12
      $region11: #{tpu_custom_call.1} parent=5 // pred_region
        %s194 = ssub.s32 %s18, 1
        // Predicated region
        $region13: #{tpu_custom_call.1} parent=11 // pred_check
          %p195 = pneg %p77
        $region14: #{tpu_custom_call.1} parent=11 // pred_check_branch
          %197 = sbr.rel (%p195) target = $region16
        $region15: #{tpu_custom_call.1} parent=11 // pred_region
          %s199 = ssub.s32 512, 512
          %200 = vsyncadd [#allocation7], %s199
          %s201 = sshll.u32 [#allocation6], 4
          %s202 = int_to_ptr.vmem [resolvable:$true] %s201
          %207 = dma.hbm_to_vmem [thread:$0]  %s1, 512, %s202, [#allocation7], 128, 128, 8
        $region16: #{tpu_custom_call.1} parent=11 // pred_fallthru
          _
        // Predicated region
        $region17: #{tpu_custom_call.1} parent=11 // pred_check
          %p208 = pneg %p98
        $region18: #{tpu_custom_call.1} parent=11 // pred_check_branch
          %210 = sbr.rel (%p208) target = $region20
        $region19: #{tpu_custom_call.1} parent=11 // pred_region
          _
        $region20: #{tpu_custom_call.1} parent=11 // pred_fallthru
          _
      $region12: #{tpu_custom_call.1} parent=5 // pred_fallthru
        _
      %p211 = scmp.lt.s32.totalorder %s18, 2
      // Predicated region
      $region21: #{tpu_custom_call.1} parent=5 // pred_check
        %p212 = pneg %p211
      $region22: #{tpu_custom_call.1} parent=5 // pred_check_branch
        %214 = sbr.rel (%p212) target = $region24
      $region23: #{tpu_custom_call.1} parent=5 // pred_region
        // Predicated region
        $region25: #{tpu_custom_call.1} parent=23 // pred_check
          %p215 = pneg %p50
        $region26: #{tpu_custom_call.1} parent=23 // pred_check_branch
          %217 = sbr.rel (%p215) target = $region28
        $region27: #{tpu_custom_call.1} parent=23 // pred_region
          %s218 = sand.u32 %s18, 1
          %s219 = scalar_lea.sflag [#allocation4], %s218
          %s220 = sand.u32 %s40, 1
          %s221 = smul.addr %s220, 8
          %s222 = scalar_lea.vmem [#allocation3], %s221
          %s224 = ssub.s32 128, 128
          %225 = vsyncadd %s219, %s224
          %s226 = smul.addr %s25, 128
          %s227 = scalar_lea.hbm %s0, %s226
          %s229 = sshll.u32 %s222, 4
          %s230 = int_to_ptr.vmem [resolvable:$true] %s229
          %232 = dma.hbm_to_vmem [thread:$0]  %s227, 128, %s230, %s219
        $region28: #{tpu_custom_call.1} parent=23 // pred_fallthru
          _
        // Predicated region
        $region29: #{tpu_custom_call.1} parent=23 // pred_check
          %p233 = pneg %p118
        $region30: #{tpu_custom_call.1} parent=23 // pred_check_branch
          %235 = sbr.rel (%p233) target = $region32
        $region31: #{tpu_custom_call.1} parent=23 // pred_region
          %p236 = scmp.lt.s32.totalorder %s25, 1
          %s237 = scalar_select %p236, %s25, 1
          %s238 = scalar_lea.vmem %s3, %s237
        $region32: #{tpu_custom_call.1} parent=23 // pred_fallthru
          _
        // Predicated region
        $region33: #{tpu_custom_call.1} parent=23 // pred_check
          %p239 = pneg %p146
        $region34: #{tpu_custom_call.1} parent=23 // pred_check_branch
          %241 = sbr.rel (%p239) target = $region36
        $region35: #{tpu_custom_call.1} parent=23 // pred_region
          %s242 = sand.u32 %s18, 1
          %s243 = scalar_lea.sflag [#allocation4], %s242
          %s244 = sand.u32 %s136, 1
          %s245 = smul.addr %s244, 8
          %s246 = scalar_lea.vmem [#allocation8], %s245
          %s248 = ssub.s32 128, 128
          %249 = vsyncadd %s243, %s248
          %s250 = sadd.s32 %s26, %s25
          %s251 = smul.addr %s250, 128
          %s252 = scalar_lea.hbm %s4, %s251
          %s254 = sshll.u32 %s246, 4
          %s255 = int_to_ptr.vmem [resolvable:$true] %s254
          %257 = dma.hbm_to_vmem [thread:$0]  %s252, 128, %s255, %s243
        $region36: #{tpu_custom_call.1} parent=23 // pred_fallthru
          _
      $region24: #{tpu_custom_call.1} parent=5 // pred_fallthru
        _
      %p258 = scmp.le.s32.totalorder 1, %s18
      %p259 = scmp.lt.s32.totalorder %s18, 3
      %p260 = pnand %p258, %p259
      %p261 = pneg %p260
      // Predicated region
      $region37: #{tpu_custom_call.1} parent=5 // pred_check
        _
      $region38: #{tpu_custom_call.1} parent=5 // pred_check_branch
        %263 = sbr.rel (%p260) target = $region40
      $region39: #{tpu_custom_call.1} parent=5 // pred_region
        %s264 = ssub.s32 %s18, 1
        %s265 = sand.u32 %s23, 1
        %s266 = scalar_lea.sflag [#allocation4], %s265
        %s267 = sand.u32 %s43, 1
        %s268 = smul.addr %s267, 8
        %s269 = scalar_lea.vmem [#allocation3], %s268
        // Predicated region
        $region41: #{tpu_custom_call.1} parent=39 // pred_check
          %p270 = pneg %p56
        $region42: #{tpu_custom_call.1} parent=39 // pred_check_branch
          %272 = sbr.rel (%p270) target = $region44
        $region43: #{tpu_custom_call.1} parent=39 // pred_region
          %273 = dma.done %s266, 128
        $region44: #{tpu_custom_call.1} parent=39 // pred_fallthru
          _
        // Predicated region
        $region45: #{tpu_custom_call.1} parent=39 // pred_check
          %p274 = pneg %p77
        $region46: #{tpu_custom_call.1} parent=39 // pred_check_branch
          %276 = sbr.rel (%p274) target = $region48
        $region47: #{tpu_custom_call.1} parent=39 // pred_region
          %277 = dma.done [#allocation7], 512
        $region48: #{tpu_custom_call.1} parent=39 // pred_fallthru
          _
        %s278 = sand.u32 %s23, 1
        %s279 = scalar_lea.sflag [#allocation4], %s278
        %s280 = sand.u32 %s139, 1
        %s281 = smul.addr %s280, 8
        %s282 = scalar_lea.vmem [#allocation8], %s281
        // Predicated region
        $region49: #{tpu_custom_call.1} parent=39 // pred_check
          %p283 = pneg %p152
        $region50: #{tpu_custom_call.1} parent=39 // pred_check_branch
          %285 = sbr.rel (%p283) target = $region52
        $region51: #{tpu_custom_call.1} parent=39 // pred_region
          %286 = dma.done %s279, 128
        $region52: #{tpu_custom_call.1} parent=39 // pred_fallthru
          _
        %s287 = sand.u32 %s23, 1
        %s288 = scalar_lea.sflag [#allocation4], %s287
        %s289 = sand.u32 %s43, 1
        %s290 = smul.addr %s289, 8
        %s291 = scalar_lea.vmem [#allocation3], %s290
        %p292 = pneg %p56
        %p293 = pneg %p53
        %p294 = pneg %p77
        %p295 = pneg %p74
        %p296 = pneg %p98
        %p297 = pneg %p95
        %p298 = scmp.lt.s32.totalorder %s27, 1
        %s299 = scalar_select %p298, %s27, 1
        %s300 = scalar_lea.vmem %s3, %s299
        %p301 = pneg %p124
        %p302 = pneg %p121
        %s303 = sand.u32 %s23, 1
        %s304 = scalar_lea.sflag [#allocation4], %s303
        %s305 = sand.u32 %s139, 1
        %s306 = smul.addr %s305, 8
        %s307 = scalar_lea.vmem [#allocation8], %s306
        %p308 = pneg %p152
        %p309 = pneg %p149
        %p310 = pneg %p180
        %p311 = pneg %p177
        %s312 = sand.u32 %s167, 1
        %s313 = scalar_lea.sflag [#allocation5], %s312
        %s314 = sand.u32 %s167, 1
        %s315 = smul.addr %s314, 8
        %s316 = scalar_lea.vmem [#allocation9], %s315
        %p317 = scmp.lt.s32.totalorder %s27, 1
        %s318 = scalar_select %p317, %s27, 1
        %s319 = scalar_lea.vmem %s3, %s318
        %p320 = scmp.eq.s32.totalorder %s28, 0
        // Predicated region
        $region53: #{tpu_custom_call.1} parent=39 // pred_check
          %p321 = pneg %p320
        $region54: #{tpu_custom_call.1} parent=39 // pred_check_branch
          %323 = sbr.rel (%p321) target = $region56
        $region55: #{tpu_custom_call.1} parent=39 // pred_region
          %v324 = vld [vmem:[%s269] sm:$0xff]
          %v325 = vld [vmem:[#allocation6] sm:$0xff]
          %v326 = vld [vmem:[#allocation6 + $0x8] sm:$0xff]
          %v327 = vld [vmem:[#allocation6 + $0x10] sm:$0xff]
          %v328 = vld [vmem:[#allocation6 + $0x18] sm:$0xff]
          %v329 = vld [vmem:[%s2] sm:$0x1]
          %v331 = vlaneseq
          %v332 = vshrl.u32 %v331, 7
          %v333 = vsub.s32 0, %v332
          %v334 = vrot.slane %v329, %v333
          %vm336 = vcmask 261120
          %v338 = vsel %vm336, %v324, 0
          %340 = vmatprep.subr.mxu0 0.0
          %341 = vmatpush1.msra.mxu0 0.0
          %342 = vmatprep.subr.mxu0 0.0
          %343 = vmatpush1.msra.mxu0 0.0
          %344 = vmatprep.subr.mxu0 0.0
          %345 = vmatpush1.msra.mxu0 0.0
          %346 = vmatprep.subr.mxu0 0.0
          %347 = vmatpush1.msra.mxu0 0.0
          %348 = vmatprep.subr.mxu0 0.0
          %349 = vmatpush1.msra.mxu0 0.0
          %350 = vmatprep.subr.mxu0 0.0
          %351 = vmatpush1.msra.mxu0 0.0
          %352 = vmatprep.subr.mxu0 0.0
          %353 = vmatpush1.msra.mxu0 0.0
          %354 = vmatprep.subr.mxu0 0.0
          %355 = vmatpush1.msra.mxu0 0.0
          %356 = vmatprep.subr.mxu0 0.0
          %357 = vmatpush1.msra.mxu0 0.0
          %358 = vmatprep.subr.mxu0 0.0
          %359 = vmatpush1.msra.mxu0 0.0
          %360 = vmatprep.subr.mxu0 0.0
          %361 = vmatpush1.msra.mxu0 0.0
          %362 = vmatprep.subr.mxu0 0.0
          %363 = vmatpush1.msra.mxu0 0.0
          %364 = vmatprep.subr.mxu0 0.0
          %365 = vmatpush1.msra.mxu0 %v328
          %366 = vmatprep.subr.mxu0 0.0
          %367 = vmatpush1.msra.mxu0 %v327
          %368 = vmatprep.subr.mxu0 0.0
          %369 = vmatpush1.msra.mxu0 %v326
          %370 = vmatprep.subr.mxu0 0.0
          %371 = vmatpush1.msra.mxu0 %v325
          %372 = vmatprep.subr.mxu0 0.0
          %373 = vmatpush2.msra.mxu0 0.0
          %374 = vmatprep.subr.mxu0 0.0
          %375 = vmatpush2.msra.mxu0 0.0
          %376 = vmatprep.subr.mxu0 0.0
          %377 = vmatpush2.msra.mxu0 0.0
          %378 = vmatprep.subr.mxu0 0.0
          %379 = vmatpush2.msra.mxu0 0.0
          %380 = vmatprep.subr.mxu0 0.0
          %381 = vmatpush2.msra.mxu0 0.0
          %382 = vmatprep.subr.mxu0 0.0
          %383 = vmatpush2.msra.mxu0 0.0
          %384 = vmatprep.subr.mxu0 0.0
          %385 = vmatpush2.msra.mxu0 0.0
          %386 = vmatprep.subr.mxu0 0.0
          %387 = vmatpush2.msra.mxu0 0.0
          %388 = vmatprep.subr.mxu0 0.0
          %389 = vmatpush2.msra.mxu0 0.0
          %390 = vmatprep.subr.mxu0 0.0
          %391 = vmatpush2.msra.mxu0 0.0
          %392 = vmatprep.subr.mxu0 0.0
          %393 = vmatpush2.msra.mxu0 0.0
          %394 = vmatprep.subr.mxu0 0.0
          %395 = vmatpush2.msra.mxu0 0.0
          %396 = vmatprep.subr.mxu0 0.0
          %397 = vmatpush2.msra.mxu0 0.0
          %398 = vmatprep.subr.mxu0 0.0
          %399 = vmatpush2.msra.mxu0 0.0
          %400 = vmatprep.subr.mxu0 0.0
          %401 = vmatpush2.msra.mxu0 0.0
          %402 = vmatprep.subr.mxu0 0.0
          %403 = vmatpush2.msra.mxu0 0.0
          %404 = vmatprep.mubr.f32.mxu0 0.0
          %405 = vmatmul.mubr.f32.gmra.mxu0 %v338
          %v406 = vpop.f32.mrf.mxu0
          %v407 = vadd.f32 %v334, %v406
          %v408 = vpop.f32.mrf.mxu0
          %409 = vdwg.mxu0
          %vm410 = vcmask 785408
          %411 = vst.msk [vmem:[#allocation2] sm:$0xff] %vm410, %v407
        $region56: #{tpu_custom_call.1} parent=39 // pred_fallthru
          _
        %s412 = smul.u32 %s28, 8
        %s413 = scalar_lea.vmem [#allocation2], %s412
        %v414 = vld [vmem:[%s413] sm:$0xff]
        %v415 = vld [vmem:[#allocation2] sm:$0xff]
        %v416 = vld [vmem:[%s319] sm:$0x1]
        %v418 = vlaneseq
        %v419 = vshrl.u32 %v418, 7
        %v420 = vsub.s32 0, %v419
        %v421 = vrot.slane %v416, %v420
        %v423 = vld [vmem:[%s282] sm:$0xff]
        %425 = vrot.lane.b32.xlu0 %v415, 96
        %v426 = vpop.permute.xlu0 %425
        %vm427 = vcmask 64512
        %v429 = vsel %vm427, %v414, 0
        %v431 = vsel %vm427, %v426, 0
        %433 = vmatprep.subr.mxu0 0.0
        %434 = vmatpush1.xpose.msra.mxu0 0.0
        %435 = vmatprep.subr.mxu0 0.0
        %436 = vmatpush1.xpose.msra.mxu0 0.0
        %437 = vmatprep.subr.mxu0 0.0
        %438 = vmatpush1.xpose.msra.mxu0 0.0
        %439 = vmatprep.subr.mxu0 0.0
        %440 = vmatpush1.xpose.msra.mxu0 0.0
        %441 = vmatprep.subr.mxu0 0.0
        %442 = vmatpush1.xpose.msra.mxu0 0.0
        %443 = vmatprep.subr.mxu0 0.0
        %444 = vmatpush1.xpose.msra.mxu0 0.0
        %445 = vmatprep.subr.mxu0 0.0
        %446 = vmatpush1.xpose.msra.mxu0 0.0
        %447 = vmatprep.subr.mxu0 0.0
        %448 = vmatpush1.xpose.msra.mxu0 0.0
        %449 = vmatprep.subr.mxu0 0.0
        %450 = vmatpush1.xpose.msra.mxu0 0.0
        %451 = vmatprep.subr.mxu0 0.0
        %452 = vmatpush1.xpose.msra.mxu0 0.0
        %453 = vmatprep.subr.mxu0 0.0
        %454 = vmatpush1.xpose.msra.mxu0 0.0
        %455 = vmatprep.subr.mxu0 0.0
        %456 = vmatpush1.xpose.msra.mxu0 0.0
        %457 = vmatprep.subr.mxu0 0.0
        %458 = vmatpush1.xpose.msra.mxu0 0.0
        %459 = vmatprep.subr.mxu0 0.0
        %460 = vmatpush1.xpose.msra.mxu0 0.0
        %461 = vmatprep.subr.mxu0 0.0
        %462 = vmatpush1.xpose.msra.mxu0 0.0
        %463 = vmatprep.subr.mxu0 0.0
        %464 = vmatpush1.xpose.msra.mxu0 %v431
        %465 = vmatprep.subr.mxu0 0.0
        %466 = vmatpush2.xpose.msra.mxu0 0.0
        %467 = vmatprep.subr.mxu0 0.0
        %468 = vmatpush2.xpose.msra.mxu0 0.0
        %469 = vmatprep.subr.mxu0 0.0
        %470 = vmatpush2.xpose.msra.mxu0 0.0
        %471 = vmatprep.subr.mxu0 0.0
        %472 = vmatpush2.xpose.msra.mxu0 0.0
        %473 = vmatprep.subr.mxu0 0.0
        %474 = vmatpush2.xpose.msra.mxu0 0.0
        %475 = vmatprep.subr.mxu0 0.0
        %476 = vmatpush2.xpose.msra.mxu0 0.0
        %477 = vmatprep.subr.mxu0 0.0
        %478 = vmatpush2.xpose.msra.mxu0 0.0
        %479 = vmatprep.subr.mxu0 0.0
        %480 = vmatpush2.xpose.msra.mxu0 0.0
        %481 = vmatprep.subr.mxu0 0.0
        %482 = vmatpush2.xpose.msra.mxu0 0.0
        %483 = vmatprep.subr.mxu0 0.0
        %484 = vmatpush2.xpose.msra.mxu0 0.0
        %485 = vmatprep.subr.mxu0 0.0
        %486 = vmatpush2.xpose.msra.mxu0 0.0
        %487 = vmatprep.subr.mxu0 0.0
        %488 = vmatpush2.xpose.msra.mxu0 0.0
        %489 = vmatprep.subr.mxu0 0.0
        %490 = vmatpush2.xpose.msra.mxu0 0.0
        %491 = vmatprep.subr.mxu0 0.0
        %492 = vmatpush2.xpose.msra.mxu0 0.0
        %493 = vmatprep.subr.mxu0 0.0
        %494 = vmatpush2.xpose.msra.mxu0 0.0
        %495 = vmatprep.subr.mxu0 0.0
        %496 = vmatpush2.xpose.msra.mxu0 0.0
        %497 = vmatprep.mubr.f32.mxu0 0.0
        %498 = vmatmul.mubr.f32.gmra.mxu0 %v429
        %v499 = vpop.f32.mrf.mxu0
        %v500 = vadd.f32 %v421, %v499
        %v501 = vpop.f32.mrf.mxu0
        %502 = vdwg.mxu0
        %v503 = vsel %vm427, %v500, -inf
        %504 = vmax.xlane.f32.xlu0 %v503
        %v505 = vpop.xlane.xlu0 %504
        %v506 = vsub.f32 %v500, %v505
        %v507 = vmul.f32 %v506, 1.442695
        %v508 = vpow.pop %v507
        %v509 = vsel %vm427, %v508, 0.0
        %510 = vadd.xlane.f32.xlu0 %v509
        %v511 = vpop.xlane.xlu0 %510
        %v512 = vrcp.pop %v511
        %v513 = vmul.f32 %v508, %v512
        %v514 = vmul.f32 %v513, %v423
        %515 = vrot.lane.b32.xlu0 %v415, 64
        %v516 = vpop.permute.xlu0 %515
        %v519 = vsel %vm427, %v514, 0
        %521 = vmatprep.subr.mxu0 0.0
        %522 = vmatpush1.msra.mxu0 0.0
        %523 = vmatprep.subr.mxu0 0.0
        %524 = vmatpush1.msra.mxu0 0.0
        %525 = vmatprep.subr.mxu0 0.0
        %526 = vmatpush1.msra.mxu0 0.0
        %527 = vmatprep.subr.mxu0 0.0
        %528 = vmatpush1.msra.mxu0 0.0
        %529 = vmatprep.subr.mxu0 0.0
        %530 = vmatpush1.msra.mxu0 0.0
        %531 = vmatprep.subr.mxu0 0.0
        %532 = vmatpush1.msra.mxu0 0.0
        %533 = vmatprep.subr.mxu0 0.0
        %534 = vmatpush1.msra.mxu0 0.0
        %535 = vmatprep.subr.mxu0 0.0
        %536 = vmatpush1.msra.mxu0 0.0
        %537 = vmatprep.subr.mxu0 0.0
        %538 = vmatpush1.msra.mxu0 0.0
        %539 = vmatprep.subr.mxu0 0.0
        %540 = vmatpush1.msra.mxu0 0.0
        %541 = vmatprep.subr.mxu0 0.0
        %542 = vmatpush1.msra.mxu0 0.0
        %543 = vmatprep.subr.mxu0 0.0
        %544 = vmatpush1.msra.mxu0 0.0
        %545 = vmatprep.subr.mxu0 0.0
        %546 = vmatpush1.msra.mxu0 0.0
        %547 = vmatprep.subr.mxu0 0.0
        %548 = vmatpush1.msra.mxu0 0.0
        %549 = vmatprep.subr.mxu0 0.0
        %550 = vmatpush1.msra.mxu0 0.0
        %551 = vmatprep.subr.mxu0 0.0
        %552 = vmatpush1.msra.mxu0 %v516
        %553 = vmatprep.subr.mxu0 0.0
        %554 = vmatpush2.msra.mxu0 0.0
        %555 = vmatprep.subr.mxu0 0.0
        %556 = vmatpush2.msra.mxu0 0.0
        %557 = vmatprep.subr.mxu0 0.0
        %558 = vmatpush2.msra.mxu0 0.0
        %559 = vmatprep.subr.mxu0 0.0
        %560 = vmatpush2.msra.mxu0 0.0
        %561 = vmatprep.subr.mxu0 0.0
        %562 = vmatpush2.msra.mxu0 0.0
        %563 = vmatprep.subr.mxu0 0.0
        %564 = vmatpush2.msra.mxu0 0.0
        %565 = vmatprep.subr.mxu0 0.0
        %566 = vmatpush2.msra.mxu0 0.0
        %567 = vmatprep.subr.mxu0 0.0
        %568 = vmatpush2.msra.mxu0 0.0
        %569 = vmatprep.subr.mxu0 0.0
        %570 = vmatpush2.msra.mxu0 0.0
        %571 = vmatprep.subr.mxu0 0.0
        %572 = vmatpush2.msra.mxu0 0.0
        %573 = vmatprep.subr.mxu0 0.0
        %574 = vmatpush2.msra.mxu0 0.0
        %575 = vmatprep.subr.mxu0 0.0
        %576 = vmatpush2.msra.mxu0 0.0
        %577 = vmatprep.subr.mxu0 0.0
        %578 = vmatpush2.msra.mxu0 0.0
        %579 = vmatprep.subr.mxu0 0.0
        %580 = vmatpush2.msra.mxu0 0.0
        %581 = vmatprep.subr.mxu0 0.0
        %582 = vmatpush2.msra.mxu0 0.0
        %583 = vmatprep.subr.mxu0 0.0
        %584 = vmatpush2.msra.mxu0 0.0
        %585 = vmatprep.mubr.f32.mxu0 0.0
        %586 = vmatmul.mubr.f32.gmra.mxu0 %v519
        %v587 = vpop.f32.mrf.mxu0
        %v588 = vadd.f32 0.0, %v587
        %v589 = vpop.f32.mrf.mxu0
        %590 = vdwg.mxu0
        %591 = vrot.lane.b32.xlu0 %v414, 120
        %v592 = vpop.permute.xlu0 %591
        %593 = vrot.lane.b32.xlu0 %v415, 88
        %v594 = vpop.permute.xlu0 %593
        %v595 = vsel %vm427, %v592, 0
        %v597 = vsel %vm427, %v594, 0
        %599 = vmatprep.subr.mxu0 0.0
        %600 = vmatpush1.xpose.msra.mxu0 0.0
        %601 = vmatprep.subr.mxu0 0.0
        %602 = vmatpush1.xpose.msra.mxu0 0.0
        %603 = vmatprep.subr.mxu0 0.0
        %604 = vmatpush1.xpose.msra.mxu0 0.0
        %605 = vmatprep.subr.mxu0 0.0
        %606 = vmatpush1.xpose.msra.mxu0 0.0
        %607 = vmatprep.subr.mxu0 0.0
        %608 = vmatpush1.xpose.msra.mxu0 0.0
        %609 = vmatprep.subr.mxu0 0.0
        %610 = vmatpush1.xpose.msra.mxu0 0.0
        %611 = vmatprep.subr.mxu0 0.0
        %612 = vmatpush1.xpose.msra.mxu0 0.0
        %613 = vmatprep.subr.mxu0 0.0
        %614 = vmatpush1.xpose.msra.mxu0 0.0
        %615 = vmatprep.subr.mxu0 0.0
        %616 = vmatpush1.xpose.msra.mxu0 0.0
        %617 = vmatprep.subr.mxu0 0.0
        %618 = vmatpush1.xpose.msra.mxu0 0.0
        %619 = vmatprep.subr.mxu0 0.0
        %620 = vmatpush1.xpose.msra.mxu0 0.0
        %621 = vmatprep.subr.mxu0 0.0
        %622 = vmatpush1.xpose.msra.mxu0 0.0
        %623 = vmatprep.subr.mxu0 0.0
        %624 = vmatpush1.xpose.msra.mxu0 0.0
        %625 = vmatprep.subr.mxu0 0.0
        %626 = vmatpush1.xpose.msra.mxu0 0.0
        %627 = vmatprep.subr.mxu0 0.0
        %628 = vmatpush1.xpose.msra.mxu0 0.0
        %629 = vmatprep.subr.mxu0 0.0
        %630 = vmatpush1.xpose.msra.mxu0 %v597
        %631 = vmatprep.subr.mxu0 0.0
        %632 = vmatpush2.xpose.msra.mxu0 0.0
        %633 = vmatprep.subr.mxu0 0.0
        %634 = vmatpush2.xpose.msra.mxu0 0.0
        %635 = vmatprep.subr.mxu0 0.0
        %636 = vmatpush2.xpose.msra.mxu0 0.0
        %637 = vmatprep.subr.mxu0 0.0
        %638 = vmatpush2.xpose.msra.mxu0 0.0
        %639 = vmatprep.subr.mxu0 0.0
        %640 = vmatpush2.xpose.msra.mxu0 0.0
        %641 = vmatprep.subr.mxu0 0.0
        %642 = vmatpush2.xpose.msra.mxu0 0.0
        %643 = vmatprep.subr.mxu0 0.0
        %644 = vmatpush2.xpose.msra.mxu0 0.0
        %645 = vmatprep.subr.mxu0 0.0
        %646 = vmatpush2.xpose.msra.mxu0 0.0
        %647 = vmatprep.subr.mxu0 0.0
        %648 = vmatpush2.xpose.msra.mxu0 0.0
        %649 = vmatprep.subr.mxu0 0.0
        %650 = vmatpush2.xpose.msra.mxu0 0.0
        %651 = vmatprep.subr.mxu0 0.0
        %652 = vmatpush2.xpose.msra.mxu0 0.0
        %653 = vmatprep.subr.mxu0 0.0
        %654 = vmatpush2.xpose.msra.mxu0 0.0
        %655 = vmatprep.subr.mxu0 0.0
        %656 = vmatpush2.xpose.msra.mxu0 0.0
        %657 = vmatprep.subr.mxu0 0.0
        %658 = vmatpush2.xpose.msra.mxu0 0.0
        %659 = vmatprep.subr.mxu0 0.0
        %660 = vmatpush2.xpose.msra.mxu0 0.0
        %661 = vmatprep.subr.mxu0 0.0
        %662 = vmatpush2.xpose.msra.mxu0 0.0
        %663 = vmatprep.mubr.f32.mxu0 0.0
        %664 = vmatmul.mubr.f32.gmra.mxu0 %v595
        %v665 = vpop.f32.mrf.mxu0
        %v666 = vadd.f32 %v421, %v665
        %v667 = vpop.f32.mrf.mxu0
        %668 = vdwg.mxu0
        %v669 = vsel %vm427, %v666, -inf
        %670 = vmax.xlane.f32.xlu0 %v669
        %v671 = vpop.xlane.xlu0 %670
        %v672 = vsub.f32 %v666, %v671
        %v673 = vmul.f32 %v672, 1.442695
        %v674 = vpow.pop %v673
        %v675 = vsel %vm427, %v674, 0.0
        %676 = vadd.xlane.f32.xlu0 %v675
        %v677 = vpop.xlane.xlu0 %676
        %v678 = vrcp.pop %v677
        %v679 = vmul.f32 %v674, %v678
        %v680 = vmul.f32 %v679, %v423
        %681 = vrot.lane.b32.xlu0 %v415, 56
        %v682 = vpop.permute.xlu0 %681
        %v685 = vsel %vm427, %v680, 0
        %687 = vmatprep.subr.mxu0 0.0
        %688 = vmatpush1.msra.mxu0 0.0
        %689 = vmatprep.subr.mxu0 0.0
        %690 = vmatpush1.msra.mxu0 0.0
        %691 = vmatprep.subr.mxu0 0.0
        %692 = vmatpush1.msra.mxu0 0.0
        %693 = vmatprep.subr.mxu0 0.0
        %694 = vmatpush1.msra.mxu0 0.0
        %695 = vmatprep.subr.mxu0 0.0
        %696 = vmatpush1.msra.mxu0 0.0
        %697 = vmatprep.subr.mxu0 0.0
        %698 = vmatpush1.msra.mxu0 0.0
        %699 = vmatprep.subr.mxu0 0.0
        %700 = vmatpush1.msra.mxu0 0.0
        %701 = vmatprep.subr.mxu0 0.0
        %702 = vmatpush1.msra.mxu0 0.0
        %703 = vmatprep.subr.mxu0 0.0
        %704 = vmatpush1.msra.mxu0 0.0
        %705 = vmatprep.subr.mxu0 0.0
        %706 = vmatpush1.msra.mxu0 0.0
        %707 = vmatprep.subr.mxu0 0.0
        %708 = vmatpush1.msra.mxu0 0.0
        %709 = vmatprep.subr.mxu0 0.0
        %710 = vmatpush1.msra.mxu0 0.0
        %711 = vmatprep.subr.mxu0 0.0
        %712 = vmatpush1.msra.mxu0 0.0
        %713 = vmatprep.subr.mxu0 0.0
        %714 = vmatpush1.msra.mxu0 0.0
        %715 = vmatprep.subr.mxu0 0.0
        %716 = vmatpush1.msra.mxu0 0.0
        %717 = vmatprep.subr.mxu0 0.0
        %718 = vmatpush1.msra.mxu0 %v682
        %719 = vmatprep.subr.mxu0 0.0
        %720 = vmatpush2.msra.mxu0 0.0
        %721 = vmatprep.subr.mxu0 0.0
        %722 = vmatpush2.msra.mxu0 0.0
        %723 = vmatprep.subr.mxu0 0.0
        %724 = vmatpush2.msra.mxu0 0.0
        %725 = vmatprep.subr.mxu0 0.0
        %726 = vmatpush2.msra.mxu0 0.0
        %727 = vmatprep.subr.mxu0 0.0
        %728 = vmatpush2.msra.mxu0 0.0
        %729 = vmatprep.subr.mxu0 0.0
        %730 = vmatpush2.msra.mxu0 0.0
        %731 = vmatprep.subr.mxu0 0.0
        %732 = vmatpush2.msra.mxu0 0.0
        %733 = vmatprep.subr.mxu0 0.0
        %734 = vmatpush2.msra.mxu0 0.0
        %735 = vmatprep.subr.mxu0 0.0
        %736 = vmatpush2.msra.mxu0 0.0
        %737 = vmatprep.subr.mxu0 0.0
        %738 = vmatpush2.msra.mxu0 0.0
        %739 = vmatprep.subr.mxu0 0.0
        %740 = vmatpush2.msra.mxu0 0.0
        %741 = vmatprep.subr.mxu0 0.0
        %742 = vmatpush2.msra.mxu0 0.0
        %743 = vmatprep.subr.mxu0 0.0
        %744 = vmatpush2.msra.mxu0 0.0
        %745 = vmatprep.subr.mxu0 0.0
        %746 = vmatpush2.msra.mxu0 0.0
        %747 = vmatprep.subr.mxu0 0.0
        %748 = vmatpush2.msra.mxu0 0.0
        %749 = vmatprep.subr.mxu0 0.0
        %750 = vmatpush2.msra.mxu0 0.0
        %751 = vmatprep.mubr.f32.mxu0 0.0
        %752 = vmatmul.mubr.f32.gmra.mxu0 %v685
        %v753 = vpop.f32.mrf.mxu0
        %v754 = vadd.f32 0.0, %v753
        %v755 = vpop.f32.mrf.mxu0
        %756 = vdwg.mxu0
        %757 = vrot.lane.b32.xlu0 %v414, 112
        %v758 = vpop.permute.xlu0 %757
        %759 = vrot.lane.b32.xlu0 %v415, 80
        %v760 = vpop.permute.xlu0 %759
        %v761 = vsel %vm427, %v758, 0
        %v763 = vsel %vm427, %v760, 0
        %765 = vmatprep.subr.mxu0 0.0
        %766 = vmatpush1.xpose.msra.mxu0 0.0
        %767 = vmatprep.subr.mxu0 0.0
        %768 = vmatpush1.xpose.msra.mxu0 0.0
        %769 = vmatprep.subr.mxu0 0.0
        %770 = vmatpush1.xpose.msra.mxu0 0.0
        %771 = vmatprep.subr.mxu0 0.0
        %772 = vmatpush1.xpose.msra.mxu0 0.0
        %773 = vmatprep.subr.mxu0 0.0
        %774 = vmatpush1.xpose.msra.mxu0 0.0
        %775 = vmatprep.subr.mxu0 0.0
        %776 = vmatpush1.xpose.msra.mxu0 0.0
        %777 = vmatprep.subr.mxu0 0.0
        %778 = vmatpush1.xpose.msra.mxu0 0.0
        %779 = vmatprep.subr.mxu0 0.0
        %780 = vmatpush1.xpose.msra.mxu0 0.0
        %781 = vmatprep.subr.mxu0 0.0
        %782 = vmatpush1.xpose.msra.mxu0 0.0
        %783 = vmatprep.subr.mxu0 0.0
        %784 = vmatpush1.xpose.msra.mxu0 0.0
        %785 = vmatprep.subr.mxu0 0.0
        %786 = vmatpush1.xpose.msra.mxu0 0.0
        %787 = vmatprep.subr.mxu0 0.0
        %788 = vmatpush1.xpose.msra.mxu0 0.0
        %789 = vmatprep.subr.mxu0 0.0
        %790 = vmatpush1.xpose.msra.mxu0 0.0
        %791 = vmatprep.subr.mxu0 0.0
        %792 = vmatpush1.xpose.msra.mxu0 0.0
        %793 = vmatprep.subr.mxu0 0.0
        %794 = vmatpush1.xpose.msra.mxu0 0.0
        %795 = vmatprep.subr.mxu0 0.0
        %796 = vmatpush1.xpose.msra.mxu0 %v763
        %797 = vmatprep.subr.mxu0 0.0
        %798 = vmatpush2.xpose.msra.mxu0 0.0
        %799 = vmatprep.subr.mxu0 0.0
        %800 = vmatpush2.xpose.msra.mxu0 0.0
        %801 = vmatprep.subr.mxu0 0.0
        %802 = vmatpush2.xpose.msra.mxu0 0.0
        %803 = vmatprep.subr.mxu0 0.0
        %804 = vmatpush2.xpose.msra.mxu0 0.0
        %805 = vmatprep.subr.mxu0 0.0
        %806 = vmatpush2.xpose.msra.mxu0 0.0
        %807 = vmatprep.subr.mxu0 0.0
        %808 = vmatpush2.xpose.msra.mxu0 0.0
        %809 = vmatprep.subr.mxu0 0.0
        %810 = vmatpush2.xpose.msra.mxu0 0.0
        %811 = vmatprep.subr.mxu0 0.0
        %812 = vmatpush2.xpose.msra.mxu0 0.0
        %813 = vmatprep.subr.mxu0 0.0
        %814 = vmatpush2.xpose.msra.mxu0 0.0
        %815 = vmatprep.subr.mxu0 0.0
        %816 = vmatpush2.xpose.msra.mxu0 0.0
        %817 = vmatprep.subr.mxu0 0.0
        %818 = vmatpush2.xpose.msra.mxu0 0.0
        %819 = vmatprep.subr.mxu0 0.0
        %820 = vmatpush2.xpose.msra.mxu0 0.0
        %821 = vmatprep.subr.mxu0 0.0
        %822 = vmatpush2.xpose.msra.mxu0 0.0
        %823 = vmatprep.subr.mxu0 0.0
        %824 = vmatpush2.xpose.msra.mxu0 0.0
        %825 = vmatprep.subr.mxu0 0.0
        %826 = vmatpush2.xpose.msra.mxu0 0.0
        %827 = vmatprep.subr.mxu0 0.0
        %828 = vmatpush2.xpose.msra.mxu0 0.0
        %829 = vmatprep.mubr.f32.mxu0 0.0
        %830 = vmatmul.mubr.f32.gmra.mxu0 %v761
        %v831 = vpop.f32.mrf.mxu0
        %v832 = vadd.f32 %v421, %v831
        %v833 = vpop.f32.mrf.mxu0
        %834 = vdwg.mxu0
        %v835 = vsel %vm427, %v832, -inf
        %836 = vmax.xlane.f32.xlu0 %v835
        %v837 = vpop.xlane.xlu0 %836
        %v838 = vsub.f32 %v832, %v837
        %v839 = vmul.f32 %v838, 1.442695
        %v840 = vpow.pop %v839
        %v841 = vsel %vm427, %v840, 0.0
        %842 = vadd.xlane.f32.xlu0 %v841
        %v843 = vpop.xlane.xlu0 %842
        %v844 = vrcp.pop %v843
        %v845 = vmul.f32 %v840, %v844
        %v846 = vmul.f32 %v845, %v423
        %847 = vrot.lane.b32.xlu0 %v415, 48
        %v848 = vpop.permute.xlu0 %847
        %v851 = vsel %vm427, %v846, 0
        %853 = vmatprep.subr.mxu0 0.0
        %854 = vmatpush1.msra.mxu0 0.0
        %855 = vmatprep.subr.mxu0 0.0
        %856 = vmatpush1.msra.mxu0 0.0
        %857 = vmatprep.subr.mxu0 0.0
        %858 = vmatpush1.msra.mxu0 0.0
        %859 = vmatprep.subr.mxu0 0.0
        %860 = vmatpush1.msra.mxu0 0.0
        %861 = vmatprep.subr.mxu0 0.0
        %862 = vmatpush1.msra.mxu0 0.0
        %863 = vmatprep.subr.mxu0 0.0
        %864 = vmatpush1.msra.mxu0 0.0
        %865 = vmatprep.subr.mxu0 0.0
        %866 = vmatpush1.msra.mxu0 0.0
        %867 = vmatprep.subr.mxu0 0.0
        %868 = vmatpush1.msra.mxu0 0.0
        %869 = vmatprep.subr.mxu0 0.0
        %870 = vmatpush1.msra.mxu0 0.0
        %871 = vmatprep.subr.mxu0 0.0
        %872 = vmatpush1.msra.mxu0 0.0
        %873 = vmatprep.subr.mxu0 0.0
        %874 = vmatpush1.msra.mxu0 0.0
        %875 = vmatprep.subr.mxu0 0.0
        %876 = vmatpush1.msra.mxu0 0.0
        %877 = vmatprep.subr.mxu0 0.0
        %878 = vmatpush1.msra.mxu0 0.0
        %879 = vmatprep.subr.mxu0 0.0
        %880 = vmatpush1.msra.mxu0 0.0
        %881 = vmatprep.subr.mxu0 0.0
        %882 = vmatpush1.msra.mxu0 0.0
        %883 = vmatprep.subr.mxu0 0.0
        %884 = vmatpush1.msra.mxu0 %v848
        %885 = vmatprep.subr.mxu0 0.0
        %886 = vmatpush2.msra.mxu0 0.0
        %887 = vmatprep.subr.mxu0 0.0
        %888 = vmatpush2.msra.mxu0 0.0
        %889 = vmatprep.subr.mxu0 0.0
        %890 = vmatpush2.msra.mxu0 0.0
        %891 = vmatprep.subr.mxu0 0.0
        %892 = vmatpush2.msra.mxu0 0.0
        %893 = vmatprep.subr.mxu0 0.0
        %894 = vmatpush2.msra.mxu0 0.0
        %895 = vmatprep.subr.mxu0 0.0
        %896 = vmatpush2.msra.mxu0 0.0
        %897 = vmatprep.subr.mxu0 0.0
        %898 = vmatpush2.msra.mxu0 0.0
        %899 = vmatprep.subr.mxu0 0.0
        %900 = vmatpush2.msra.mxu0 0.0
        %901 = vmatprep.subr.mxu0 0.0
        %902 = vmatpush2.msra.mxu0 0.0
        %903 = vmatprep.subr.mxu0 0.0
        %904 = vmatpush2.msra.mxu0 0.0
        %905 = vmatprep.subr.mxu0 0.0
        %906 = vmatpush2.msra.mxu0 0.0
        %907 = vmatprep.subr.mxu0 0.0
        %908 = vmatpush2.msra.mxu0 0.0
        %909 = vmatprep.subr.mxu0 0.0
        %910 = vmatpush2.msra.mxu0 0.0
        %911 = vmatprep.subr.mxu0 0.0
        %912 = vmatpush2.msra.mxu0 0.0
        %913 = vmatprep.subr.mxu0 0.0
        %914 = vmatpush2.msra.mxu0 0.0
        %915 = vmatprep.subr.mxu0 0.0
        %916 = vmatpush2.msra.mxu0 0.0
        %917 = vmatprep.mubr.f32.mxu0 0.0
        %918 = vmatmul.mubr.f32.gmra.mxu0 %v851
        %v919 = vpop.f32.mrf.mxu0
        %v920 = vadd.f32 0.0, %v919
        %v921 = vpop.f32.mrf.mxu0
        %922 = vdwg.mxu0
        %923 = vrot.lane.b32.xlu0 %v414, 104
        %v924 = vpop.permute.xlu0 %923
        %925 = vrot.lane.b32.xlu0 %v415, 72
        %v926 = vpop.permute.xlu0 %925
        %v927 = vsel %vm427, %v924, 0
        %v929 = vsel %vm427, %v926, 0
        %931 = vmatprep.subr.mxu0 0.0
        %932 = vmatpush1.xpose.msra.mxu0 0.0
        %933 = vmatprep.subr.mxu0 0.0
        %934 = vmatpush1.xpose.msra.mxu0 0.0
        %935 = vmatprep.subr.mxu0 0.0
        %936 = vmatpush1.xpose.msra.mxu0 0.0
        %937 = vmatprep.subr.mxu0 0.0
        %938 = vmatpush1.xpose.msra.mxu0 0.0
        %939 = vmatprep.subr.mxu0 0.0
        %940 = vmatpush1.xpose.msra.mxu0 0.0
        %941 = vmatprep.subr.mxu0 0.0
        %942 = vmatpush1.xpose.msra.mxu0 0.0
        %943 = vmatprep.subr.mxu0 0.0
        %944 = vmatpush1.xpose.msra.mxu0 0.0
        %945 = vmatprep.subr.mxu0 0.0
        %946 = vmatpush1.xpose.msra.mxu0 0.0
        %947 = vmatprep.subr.mxu0 0.0
        %948 = vmatpush1.xpose.msra.mxu0 0.0
        %949 = vmatprep.subr.mxu0 0.0
        %950 = vmatpush1.xpose.msra.mxu0 0.0
        %951 = vmatprep.subr.mxu0 0.0
        %952 = vmatpush1.xpose.msra.mxu0 0.0
        %953 = vmatprep.subr.mxu0 0.0
        %954 = vmatpush1.xpose.msra.mxu0 0.0
        %955 = vmatprep.subr.mxu0 0.0
        %956 = vmatpush1.xpose.msra.mxu0 0.0
        %957 = vmatprep.subr.mxu0 0.0
        %958 = vmatpush1.xpose.msra.mxu0 0.0
        %959 = vmatprep.subr.mxu0 0.0
        %960 = vmatpush1.xpose.msra.mxu0 0.0
        %961 = vmatprep.subr.mxu0 0.0
        %962 = vmatpush1.xpose.msra.mxu0 %v929
        %963 = vmatprep.subr.mxu0 0.0
        %964 = vmatpush2.xpose.msra.mxu0 0.0
        %965 = vmatprep.subr.mxu0 0.0
        %966 = vmatpush2.xpose.msra.mxu0 0.0
        %967 = vmatprep.subr.mxu0 0.0
        %968 = vmatpush2.xpose.msra.mxu0 0.0
        %969 = vmatprep.subr.mxu0 0.0
        %970 = vmatpush2.xpose.msra.mxu0 0.0
        %971 = vmatprep.subr.mxu0 0.0
        %972 = vmatpush2.xpose.msra.mxu0 0.0
        %973 = vmatprep.subr.mxu0 0.0
        %974 = vmatpush2.xpose.msra.mxu0 0.0
        %975 = vmatprep.subr.mxu0 0.0
        %976 = vmatpush2.xpose.msra.mxu0 0.0
        %977 = vmatprep.subr.mxu0 0.0
        %978 = vmatpush2.xpose.msra.mxu0 0.0
        %979 = vmatprep.subr.mxu0 0.0
        %980 = vmatpush2.xpose.msra.mxu0 0.0
        %981 = vmatprep.subr.mxu0 0.0
        %982 = vmatpush2.xpose.msra.mxu0 0.0
        %983 = vmatprep.subr.mxu0 0.0
        %984 = vmatpush2.xpose.msra.mxu0 0.0
        %985 = vmatprep.subr.mxu0 0.0
        %986 = vmatpush2.xpose.msra.mxu0 0.0
        %987 = vmatprep.subr.mxu0 0.0
        %988 = vmatpush2.xpose.msra.mxu0 0.0
        %989 = vmatprep.subr.mxu0 0.0
        %990 = vmatpush2.xpose.msra.mxu0 0.0
        %991 = vmatprep.subr.mxu0 0.0
        %992 = vmatpush2.xpose.msra.mxu0 0.0
        %993 = vmatprep.subr.mxu0 0.0
        %994 = vmatpush2.xpose.msra.mxu0 0.0
        %995 = vmatprep.mubr.f32.mxu0 0.0
        %996 = vmatmul.mubr.f32.gmra.mxu0 %v927
        %v997 = vpop.f32.mrf.mxu0
        %v998 = vadd.f32 %v421, %v997
        %v999 = vpop.f32.mrf.mxu0
        %1000 = vdwg.mxu0
        %v1001 = vsel %vm427, %v998, -inf
        %1002 = vmax.xlane.f32.xlu0 %v1001
        %v1003 = vpop.xlane.xlu0 %1002
        %v1004 = vsub.f32 %v998, %v1003
        %v1005 = vmul.f32 %v1004, 1.442695
        %v1006 = vpow.pop %v1005
        %v1007 = vsel %vm427, %v1006, 0.0
        %1008 = vadd.xlane.f32.xlu0 %v1007
        %v1009 = vpop.xlane.xlu0 %1008
        %v1010 = vrcp.pop %v1009
        %v1011 = vmul.f32 %v1006, %v1010
        %v1012 = vmul.f32 %v1011, %v423
        %1013 = vrot.lane.b32.xlu0 %v415, 40
        %v1014 = vpop.permute.xlu0 %1013
        %v1017 = vsel %vm427, %v1012, 0
        %1019 = vmatprep.subr.mxu0 0.0
        %1020 = vmatpush1.msra.mxu0 0.0
        %1021 = vmatprep.subr.mxu0 0.0
        %1022 = vmatpush1.msra.mxu0 0.0
        %1023 = vmatprep.subr.mxu0 0.0
        %1024 = vmatpush1.msra.mxu0 0.0
        %1025 = vmatprep.subr.mxu0 0.0
        %1026 = vmatpush1.msra.mxu0 0.0
        %1027 = vmatprep.subr.mxu0 0.0
        %1028 = vmatpush1.msra.mxu0 0.0
        %1029 = vmatprep.subr.mxu0 0.0
        %1030 = vmatpush1.msra.mxu0 0.0
        %1031 = vmatprep.subr.mxu0 0.0
        %1032 = vmatpush1.msra.mxu0 0.0
        %1033 = vmatprep.subr.mxu0 0.0
        %1034 = vmatpush1.msra.mxu0 0.0
        %1035 = vmatprep.subr.mxu0 0.0
        %1036 = vmatpush1.msra.mxu0 0.0
        %1037 = vmatprep.subr.mxu0 0.0
        %1038 = vmatpush1.msra.mxu0 0.0
        %1039 = vmatprep.subr.mxu0 0.0
        %1040 = vmatpush1.msra.mxu0 0.0
        %1041 = vmatprep.subr.mxu0 0.0
        %1042 = vmatpush1.msra.mxu0 0.0
        %1043 = vmatprep.subr.mxu0 0.0
        %1044 = vmatpush1.msra.mxu0 0.0
        %1045 = vmatprep.subr.mxu0 0.0
        %1046 = vmatpush1.msra.mxu0 0.0
        %1047 = vmatprep.subr.mxu0 0.0
        %1048 = vmatpush1.msra.mxu0 0.0
        %1049 = vmatprep.subr.mxu0 0.0
        %1050 = vmatpush1.msra.mxu0 %v1014
        %1051 = vmatprep.subr.mxu0 0.0
        %1052 = vmatpush2.msra.mxu0 0.0
        %1053 = vmatprep.subr.mxu0 0.0
        %1054 = vmatpush2.msra.mxu0 0.0
        %1055 = vmatprep.subr.mxu0 0.0
        %1056 = vmatpush2.msra.mxu0 0.0
        %1057 = vmatprep.subr.mxu0 0.0
        %1058 = vmatpush2.msra.mxu0 0.0
        %1059 = vmatprep.subr.mxu0 0.0
        %1060 = vmatpush2.msra.mxu0 0.0
        %1061 = vmatprep.subr.mxu0 0.0
        %1062 = vmatpush2.msra.mxu0 0.0
        %1063 = vmatprep.subr.mxu0 0.0
        %1064 = vmatpush2.msra.mxu0 0.0
        %1065 = vmatprep.subr.mxu0 0.0
        %1066 = vmatpush2.msra.mxu0 0.0
        %1067 = vmatprep.subr.mxu0 0.0
        %1068 = vmatpush2.msra.mxu0 0.0
        %1069 = vmatprep.subr.mxu0 0.0
        %1070 = vmatpush2.msra.mxu0 0.0
        %1071 = vmatprep.subr.mxu0 0.0
        %1072 = vmatpush2.msra.mxu0 0.0
        %1073 = vmatprep.subr.mxu0 0.0
        %1074 = vmatpush2.msra.mxu0 0.0
        %1075 = vmatprep.subr.mxu0 0.0
        %1076 = vmatpush2.msra.mxu0 0.0
        %1077 = vmatprep.subr.mxu0 0.0
        %1078 = vmatpush2.msra.mxu0 0.0
        %1079 = vmatprep.subr.mxu0 0.0
        %1080 = vmatpush2.msra.mxu0 0.0
        %1081 = vmatprep.subr.mxu0 0.0
        %1082 = vmatpush2.msra.mxu0 0.0
        %1083 = vmatprep.mubr.f32.mxu0 0.0
        %1084 = vmatmul.mubr.f32.gmra.mxu0 %v1017
        %v1085 = vpop.f32.mrf.mxu0
        %v1086 = vadd.f32 0.0, %v1085
        %v1087 = vpop.f32.mrf.mxu0
        %1088 = vdwg.mxu0
        %1090 = vrot.lane.b32.xlu0 %v754, 8
        %v1091 = vpop.permute.xlu0 %1090
        %1094 = vrot.lane.b32.xlu0 %v920, 16
        %v1095 = vpop.permute.xlu0 %1094
        %1098 = vrot.lane.b32.xlu0 %v1086, 24
        %v1099 = vpop.permute.xlu0 %1098
        %v1101 = vsel %vm427, %v588, %v1091
        %vm1102 = vcmask 130048
        %v1103 = vsel %vm1102, %v1101, %v1095
        %vm1104 = vcmask 195584
        %v1105 = vsel %vm1104, %v1103, %v1099
        %vm1106 = vcmask 261120
        %1107 = vst.msk [vmem:[%s316] sm:$0xff] %vm1106, %v1105
        %s1108 = sand.u32 %s167, 1
        %s1109 = scalar_lea.sflag [#allocation5], %s1108
        %s1110 = sand.u32 %s167, 1
        %s1111 = smul.addr %s1110, 8
        %s1112 = scalar_lea.vmem [#allocation9], %s1111
        // Predicated region
        $region57: #{tpu_custom_call.1} parent=39 // pred_check
          %p1113 = pneg %p177
        $region58: #{tpu_custom_call.1} parent=39 // pred_check_branch
          %1115 = sbr.rel (%p1113) target = $region60
        $region59: #{tpu_custom_call.1} parent=39 // pred_region
          %s1117 = ssub.s32 128, 128
          %1118 = vsyncadd %s1109, %s1117
          %s1119 = sadd.s32 %s28, %s27
          %s1120 = smul.addr %s1119, 128
          %s1121 = scalar_lea.hbm %s5, %s1120
          %s1123 = sshll.u32 %s1112, 4
          %s1124 = int_to_ptr.vmem [resolvable:$true] %s1123
          %1126 = dma.vmem_to_hbm [thread:$0]  %s1124, 128, %s1121, %s1109
        $region60: #{tpu_custom_call.1} parent=39 // pred_fallthru
          _
      $region40: #{tpu_custom_call.1} parent=5 // pred_fallthru
        _
      %p1127 = scmp.le.s32.totalorder 2, %s18
      // Predicated region
      $region61: #{tpu_custom_call.1} parent=5 // pred_check
        %p1128 = pneg %p1127
      $region62: #{tpu_custom_call.1} parent=5 // pred_check_branch
        %1130 = sbr.rel (%p1128) target = $region64
      $region63: #{tpu_custom_call.1} parent=5 // pred_region
        %s1131 = ssub.s32 %s18, 2
        // Predicated region
        $region65: #{tpu_custom_call.1} parent=63 // pred_check
          %p1132 = pneg %p183
        $region66: #{tpu_custom_call.1} parent=63 // pred_check_branch
          %1134 = sbr.rel (%p1132) target = $region68
        $region67: #{tpu_custom_call.1} parent=63 // pred_region
          %s1135 = sand.u32 %s168, 1
          %s1136 = scalar_lea.sflag [#allocation5], %s1135
          %s1137 = sand.u32 %s168, 1
          %s1138 = smul.addr %s1137, 8
          %s1139 = scalar_lea.vmem [#allocation9], %s1138
          %1140 = dma.done %s1136, 128
        $region68: #{tpu_custom_call.1} parent=63 // pred_fallthru
          _
      $region64: #{tpu_custom_call.1} parent=5 // pred_fallthru
        _
    $region6: #{tpu_custom_call.1} parent=1 // loop_footer
      %s22 = sadd.s32 1, %s18
    $region7: #{tpu_custom_call.1} parent=1 // loop_footer_branch
      %17 = sbr.rel target = $region3
    $region8: #{tpu_custom_call.1} parent=1 // loop_exit
      _
    %1141 = vsyncpa [#allocation4], 1
    %s1142 = scalar_lea.sflag [#allocation4], 1
    %1143 = vsyncpa %s1142, 1
    %1144 = vsyncpa [#allocation7], 1
    %1145 = vsyncpa [#allocation5], 1
    %s1146 = scalar_lea.sflag [#allocation5], 1
    %1147 = vsyncpa %s1146, 1

// kernel: tpu_custom_call.1
$region0: #{tpu_custom_call.1}
  #allocation0 [shape = 'u32[]', space=smem, size = 0x4, offset = 0x4, fixed_abs, tag = 'smem constant byte address 0x4 - core index']
  #allocation1 [shape = 'u32[144,128]{1,0:T(1,128)}', space=vmem, size = 0x12000, scoped, tag = 'internal scratch']
  #allocation2 [shape = 'f32[8,96]{1,0:T(8,128)}', space=vmem, size = 0x1000, scoped, tag = 'scratch operand']
  %s0 = inlined_call_operand.hbm [shape: f32[2,8,32], index: 0, kind: input, shape index: {}]
  %s1 = inlined_call_operand.hbm [shape: f32[32,96], index: 1, kind: input, shape index: {}]
  %s2 = inlined_call_operand.vmem [shape: f32[1,96], index: 2, kind: input, shape index: {}]
  %s3 = inlined_call_operand.vmem [shape: f32[2,1,8], index: 3, kind: input, shape index: {}]
  %s4 = inlined_call_operand.hbm [shape: f32[2,8,8], index: 4, kind: input, shape index: {}]
  %s5 = inlined_call_operand.hbm [shape: f32[2,8,32], index: 5, kind: output, shape index: {}]
  %s6 = sld [smem:[#allocation0]]
  $region69: #{tpu_custom_call.1} parent=0
    _
  %s8 = ssub.s32 1, %s6
  %s9 = scalar_select 0, %s8, %s6
  $region1: #{tpu_custom_call.1} parent=0
    #allocation3 [shape = 'u8[8192]{0}', space=vmem, size = 0x2000, scoped, tag = 'input window, operand 0']
    #allocation4 [shape = 's32[2]{0}', space=sflag, size = 0x8, scoped, tag = 'scoped memory for tpu_custom_call.1']
    #allocation5 [shape = 's32[2]{0}', space=sflag, size = 0x8, scoped, tag = 'scoped memory for tpu_custom_call.1']
    #allocation6 [shape = 'u8[16384]{0}', space=vmem, size = 0x4000, scoped, tag = 'input window, operand 1, single buffered']
    #allocation7 [shape = 's32[1]{0}', space=sflag, size = 0x4, scoped, tag = 'scoped memory for tpu_custom_call.1']
    #allocation8 [shape = 'u8[8192]{0}', space=vmem, size = 0x2000, scoped, tag = 'input window, operand 4']
    #allocation9 [shape = 'u8[8192]{0}', space=vmem, size = 0x2000, scoped, tag = 'output window, operand 0']
    %10 = vsyncpa [#allocation4], 0
    %s11 = scalar_lea.sflag [#allocation4], 1
    %12 = vsyncpa %s11, 0
    %13 = vsyncpa [#allocation7], 0
    %14 = vsyncpa [#allocation5], 0
    %s15 = scalar_lea.sflag [#allocation5], 1
    %16 = vsyncpa %s15, 0
    loop: start=0, step=1, limit=4
    $region2: #{tpu_custom_call.1} parent=1 // loop_pre_header
      _
    $region3: #{tpu_custom_call.1} parent=1 // loop_header
      %s18 = sphi 0, %s22
      %p19 = scmp.ge.s32.totalorder %s18, 4
      %s25 = sphi 0, %s37
      %s26 = sphi 0, %s33
      %s27 = sphi 0, %s25
      %s28 = sphi 0, %s26
      %s29 = sphi 0, %s27
      %s30 = sphi 0, %s28
      %s40 = sphi 0, %s42
      %s43 = sphi 0, %s40
      %s44 = sphi 0, %s43
      %s60 = sphi 0, %s44
      %s64 = sphi 0, %s64
      %s66 = sphi 0, %s64
      %s67 = sphi 0, %s66
      %s81 = sphi 0, %s67
      %s85 = sphi 0, %s85
      %s87 = sphi 0, %s85
      %s88 = sphi 0, %s87
      %s102 = sphi 0, %s88
      %s108 = sphi 0, %s110
      %s111 = sphi 0, %s108
      %s112 = sphi 0, %s111
      %s128 = sphi 0, %s112
      %s136 = sphi 0, %s138
      %s139 = sphi 0, %s136
      %s140 = sphi 0, %s139
      %s156 = sphi 0, %s140
      %s164 = sphi 0, %s166
      %s167 = sphi 0, %s164
      %s168 = sphi 0, %s167
      %s184 = sphi 0, %s168
    $region4: #{tpu_custom_call.1} parent=1 // loop_header_branch
      %21 = sbr.rel (%p19) target = $region8
    $region5: #{tpu_custom_call.1} parent=1 // loop_body
      %s23 = ssub.s32 %s18, 1
      %s24 = ssub.s32 %s18, 2
      %s31 = sadd.s32 1, %s26
      %p32 = scmp.ge.s32.totalorder %s31, 1
      %s33 = scalar_select %p32, 0, %s31
      %s34 = sadd.s32 1, %s25
      %s35 = scalar_select %p32, %s34, %s25
      %p36 = scmp.ge.s32.totalorder %s35, 2
      %s37 = scalar_select %p36, 0, %s35
      %s38 = ssub.s32 %s25, %s37
      %p39 = scmp.eq.s32.totalorder %s38, 0
      %s41 = sadd.s32 %s40, 1
      %s42 = scalar_select %p39, %s40, %s41
      %p45 = pneg %p39
      %p46 = scmp.eq.s32.totalorder %s18, 1
      %p47 = por %p45, %p46
      %p48 = scmp.ne.s32.totalorder %s40, %s43
      %p49 = scmp.eq.s32.totalorder %s18, 0
      %p50 = por %p48, %p49
      %p51 = scmp.ne.s32.totalorder %s40, %s43
      %p52 = scmp.eq.s32.totalorder %s23, 1
      %p53 = por %p51, %p52
      %p54 = scmp.ne.s32.totalorder %s43, %s44
      %p55 = scmp.eq.s32.totalorder %s23, 0
      %p56 = por %p54, %p55
      %p57 = scmp.ne.s32.totalorder %s43, %s44
      %p58 = scmp.eq.s32.totalorder %s24, 1
      %p59 = por %p57, %p58
      %p61 = scmp.ne.s32.totalorder %s44, %s60
      %p62 = scmp.eq.s32.totalorder %s24, 0
      %p63 = por %p61, %p62
      %s65 = sadd.s32 %s64, 1
      %p68 = scmp.eq.s32.totalorder %s18, 1
      %p69 = scmp.ne.s32.totalorder %s64, %s66
      %p70 = scmp.eq.s32.totalorder %s18, 0
      %p71 = por %p69, %p70
      %p72 = scmp.ne.s32.totalorder %s64, %s66
      %p73 = scmp.eq.s32.totalorder %s23, 1
      %p74 = por %p72, %p73
      %p75 = scmp.ne.s32.totalorder %s66, %s67
      %p76 = scmp.eq.s32.totalorder %s23, 0
      %p77 = por %p75, %p76
      %p78 = scmp.ne.s32.totalorder %s66, %s67
      %p79 = scmp.eq.s32.totalorder %s24, 1
      %p80 = por %p78, %p79
      %p82 = scmp.ne.s32.totalorder %s67, %s81
      %p83 = scmp.eq.s32.totalorder %s24, 0
      %p84 = por %p82, %p83
      %s86 = sadd.s32 %s85, 1
      %p89 = scmp.eq.s32.totalorder %s18, 1
      %p90 = scmp.ne.s32.totalorder %s85, %s87
      %p91 = scmp.eq.s32.totalorder %s18, 0
      %p92 = por %p90, %p91
      %p93 = scmp.ne.s32.totalorder %s85, %s87
      %p94 = scmp.eq.s32.totalorder %s23, 1
      %p95 = por %p93, %p94
      %p96 = scmp.ne.s32.totalorder %s87, %s88
      %p97 = scmp.eq.s32.totalorder %s23, 0
      %p98 = por %p96, %p97
      %p99 = scmp.ne.s32.totalorder %s87, %s88
      %p100 = scmp.eq.s32.totalorder %s24, 1
      %p101 = por %p99, %p100
      %p103 = scmp.ne.s32.totalorder %s88, %s102
      %p104 = scmp.eq.s32.totalorder %s24, 0
      %p105 = por %p103, %p104
      %s106 = ssub.s32 %s25, %s37
      %p107 = scmp.eq.s32.totalorder %s106, 0
      %s109 = sadd.s32 %s108, 1
      %s110 = scalar_select %p107, %s108, %s109
      %p113 = pneg %p107
      %p114 = scmp.eq.s32.totalorder %s18, 1
      %p115 = por %p113, %p114
      %p116 = scmp.ne.s32.totalorder %s108, %s111
      %p117 = scmp.eq.s32.totalorder %s18, 0
      %p118 = por %p116, %p117
      %p119 = scmp.ne.s32.totalorder %s108, %s111
      %p120 = scmp.eq.s32.totalorder %s23, 1
      %p121 = por %p119, %p120
      %p122 = scmp.ne.s32.totalorder %s111, %s112
      %p123 = scmp.eq.s32.totalorder %s23, 0
      %p124 = por %p122, %p123
      %p125 = scmp.ne.s32.totalorder %s111, %s112
      %p126 = scmp.eq.s32.totalorder %s24, 1
      %p127 = por %p125, %p126
      %p129 = scmp.ne.s32.totalorder %s112, %s128
      %p130 = scmp.eq.s32.totalorder %s24, 0
      %p131 = por %p129, %p130
      %s132 = ssub.s32 %s25, %s37
      %s133 = ssub.s32 %s26, %s33
      %s134 = sor.u32 %s132, %s133
      %p135 = scmp.eq.s32.totalorder %s134, 0
      %s137 = sadd.s32 %s136, 1
      %s138 = scalar_select %p135, %s136, %s137
      %p141 = pneg %p135
      %p142 = scmp.eq.s32.totalorder %s18, 1
      %p143 = por %p141, %p142
      %p144 = scmp.ne.s32.totalorder %s136, %s139
      %p145 = scmp.eq.s32.totalorder %s18, 0
      %p146 = por %p144, %p145
      %p147 = scmp.ne.s32.totalorder %s136, %s139
      %p148 = scmp.eq.s32.totalorder %s23, 1
      %p149 = por %p147, %p148
      %p150 = scmp.ne.s32.totalorder %s139, %s140
      %p151 = scmp.eq.s32.totalorder %s23, 0
      %p152 = por %p150, %p151
      %p153 = scmp.ne.s32.totalorder %s139, %s140
      %p154 = scmp.eq.s32.totalorder %s24, 1
      %p155 = por %p153, %p154
      %p157 = scmp.ne.s32.totalorder %s140, %s156
      %p158 = scmp.eq.s32.totalorder %s24, 0
      %p159 = por %p157, %p158
      %s160 = ssub.s32 %s25, %s37
      %s161 = ssub.s32 %s26, %s33
      %s162 = sor.u32 %s160, %s161
      %p163 = scmp.eq.s32.totalorder %s162, 0
      %s165 = sadd.s32 %s164, 1
      %s166 = scalar_select %p163, %s164, %s165
      %p169 = pneg %p163
      %p170 = scmp.eq.s32.totalorder %s18, 1
      %p171 = por %p169, %p170
      %p172 = scmp.ne.s32.totalorder %s164, %s167
      %p173 = scmp.eq.s32.totalorder %s18, 0
      %p174 = por %p172, %p173
      %p175 = scmp.ne.s32.totalorder %s164, %s167
      %p176 = scmp.eq.s32.totalorder %s23, 1
      %p177 = por %p175, %p176
      %p178 = scmp.ne.s32.totalorder %s167, %s168
      %p179 = scmp.eq.s32.totalorder %s23, 0
      %p180 = por %p178, %p179
      %p181 = scmp.ne.s32.totalorder %s167, %s168
      %p182 = scmp.eq.s32.totalorder %s24, 1
      %p183 = por %p181, %p182
      %p185 = scmp.ne.s32.totalorder %s168, %s184
      %p186 = scmp.eq.s32.totalorder %s24, 0
      %p187 = por %p185, %p186
      %p188 = scmp.le.s32.totalorder 1, %s18
      %p189 = scmp.lt.s32.totalorder %s18, 3
      %p190 = pnand %p188, %p189
      %p191 = pneg %p190
      // Predicated region
      $region9: #{tpu_custom_call.1} parent=5 // pred_check
        _
      $region10: #{tpu_custom_call.1} parent=5 // pred_check_branch
        %193 = sbr.rel (%p190) target = $region12
      $region11: #{tpu_custom_call.1} parent=5 // pred_region
        %s194 = ssub.s32 %s18, 1
        // Predicated region
        $region13: #{tpu_custom_call.1} parent=11 // pred_check
          %p195 = pneg %p77
        $region14: #{tpu_custom_call.1} parent=11 // pred_check_branch
          %197 = sbr.rel (%p195) target = $region16
        $region15: #{tpu_custom_call.1} parent=11 // pred_region
          %s199 = ssub.s32 512, 512
          %200 = vsyncadd [#allocation7], %s199
          %s201 = sshll.u32 [#allocation6], 4
          %s202 = int_to_ptr.vmem [resolvable:$true] %s201
          %207 = dma.hbm_to_vmem [thread:$0]  %s1, 512, %s202, [#allocation7], 128, 128, 8
        $region16: #{tpu_custom_call.1} parent=11 // pred_fallthru
          _
        // Predicated region
        $region17: #{tpu_custom_call.1} parent=11 // pred_check
          %p208 = pneg %p98
        $region18: #{tpu_custom_call.1} parent=11 // pred_check_branch
          %210 = sbr.rel (%p208) target = $region20
        $region19: #{tpu_custom_call.1} parent=11 // pred_region
          _
        $region20: #{tpu_custom_call.1} parent=11 // pred_fallthru
          _
      $region12: #{tpu_custom_call.1} parent=5 // pred_fallthru
        _
      %p211 = scmp.lt.s32.totalorder %s18, 2
      // Predicated region
      $region21: #{tpu_custom_call.1} parent=5 // pred_check
        %p212 = pneg %p211
      $region22: #{tpu_custom_call.1} parent=5 // pred_check_branch
        %214 = sbr.rel (%p212) target = $region24
      $region23: #{tpu_custom_call.1} parent=5 // pred_region
        // Predicated region
        $region25: #{tpu_custom_call.1} parent=23 // pred_check
          %p215 = pneg %p50
        $region26: #{tpu_custom_call.1} parent=23 // pred_check_branch
          %217 = sbr.rel (%p215) target = $region28
        $region27: #{tpu_custom_call.1} parent=23 // pred_region
          %s218 = sand.u32 %s18, 1
          %s219 = scalar_lea.sflag [#allocation4], %s218
          %s220 = sand.u32 %s40, 1
          %s221 = smul.addr %s220, 8
          %s222 = scalar_lea.vmem [#allocation3], %s221
          %s224 = ssub.s32 128, 128
          %225 = vsyncadd %s219, %s224
          %s226 = smul.addr %s25, 128
          %s227 = scalar_lea.hbm %s0, %s226
          %s229 = sshll.u32 %s222, 4
          %s230 = int_to_ptr.vmem [resolvable:$true] %s229
          %232 = dma.hbm_to_vmem [thread:$0]  %s227, 128, %s230, %s219
        $region28: #{tpu_custom_call.1} parent=23 // pred_fallthru
          _
        // Predicated region
        $region29: #{tpu_custom_call.1} parent=23 // pred_check
          %p233 = pneg %p118
        $region30: #{tpu_custom_call.1} parent=23 // pred_check_branch
          %235 = sbr.rel (%p233) target = $region32
        $region31: #{tpu_custom_call.1} parent=23 // pred_region
          %p236 = scmp.lt.s32.totalorder %s25, 1
          %s237 = scalar_select %p236, %s25, 1
          %s238 = scalar_lea.vmem %s3, %s237
        $region32: #{tpu_custom_call.1} parent=23 // pred_fallthru
          _
        // Predicated region
        $region33: #{tpu_custom_call.1} parent=23 // pred_check
          %p239 = pneg %p146
        $region34: #{tpu_custom_call.1} parent=23 // pred_check_branch
          %241 = sbr.rel (%p239) target = $region36
        $region35: #{tpu_custom_call.1} parent=23 // pred_region
          %s242 = sand.u32 %s18, 1
          %s243 = scalar_lea.sflag [#allocation4], %s242
          %s244 = sand.u32 %s136, 1
          %s245 = smul.addr %s244, 8
          %s246 = scalar_lea.vmem [#allocation8], %s245
          %s248 = ssub.s32 128, 128
          %249 = vsyncadd %s243, %s248
          %s250 = sadd.s32 %s26, %s25
          %s251 = smul.addr %s250, 128
          %s252 = scalar_lea.hbm %s4, %s251
          %s254 = sshll.u32 %s246, 4
          %s255 = int_to_ptr.vmem [resolvable:$true] %s254
          %257 = dma.hbm_to_vmem [thread:$0]  %s252, 128, %s255, %s243
        $region36: #{tpu_custom_call.1} parent=23 // pred_fallthru
          _
      $region24: #{tpu_custom_call.1} parent=5 // pred_fallthru
        _
      %p258 = scmp.le.s32.totalorder 1, %s18
      %p259 = scmp.lt.s32.totalorder %s18, 3
      %p260 = pnand %p258, %p259
      %p261 = pneg %p260
      // Predicated region
      $region37: #{tpu_custom_call.1} parent=5 // pred_check
        _
      $region38: #{tpu_custom_call.1} parent=5 // pred_check_branch
        %263 = sbr.rel (%p260) target = $region40
      $region39: #{tpu_custom_call.1} parent=5 // pred_region
        %s264 = ssub.s32 %s18, 1
        %s265 = sand.u32 %s23, 1
        %s266 = scalar_lea.sflag [#allocation4], %s265
        %s267 = sand.u32 %s43, 1
        %s268 = smul.addr %s267, 8
        %s269 = scalar_lea.vmem [#allocation3], %s268
        // Predicated region
        $region41: #{tpu_custom_call.1} parent=39 // pred_check
          %p270 = pneg %p56
        $region42: #{tpu_custom_call.1} parent=39 // pred_check_branch
          %272 = sbr.rel (%p270) target = $region44
        $region43: #{tpu_custom_call.1} parent=39 // pred_region
          %273 = dma.done %s266, 128
        $region44: #{tpu_custom_call.1} parent=39 // pred_fallthru
          _
        // Predicated region
        $region45: #{tpu_custom_call.1} parent=39 // pred_check
          %p274 = pneg %p77
        $region46: #{tpu_custom_call.1} parent=39 // pred_check_branch
          %276 = sbr.rel (%p274) target = $region48
        $region47: #{tpu_custom_call.1} parent=39 // pred_region
          %277 = dma.done [#allocation7], 512
        $region48: #{tpu_custom_call.1} parent=39 // pred_fallthru
          _
        %s278 = sand.u32 %s23, 1
        %s279 = scalar_lea.sflag [#allocation4], %s278
        %s280 = sand.u32 %s139, 1
        %s281 = smul.addr %s280, 8
        %s282 = scalar_lea.vmem [#allocation8], %s281
        // Predicated region
        $region49: #{tpu_custom_call.1} parent=39 // pred_check
          %p283 = pneg %p152
        $region50: #{tpu_custom_call.1} parent=39 // pred_check_branch
          %285 = sbr.rel (%p283) target = $region52
        $region51: #{tpu_custom_call.1} parent=39 // pred_region
          %286 = dma.done %s279, 128
        $region52: #{tpu_custom_call.1} parent=39 // pred_fallthru
          _
        %s287 = sand.u32 %s23, 1
        %s288 = scalar_lea.sflag [#allocation4], %s287
        %s289 = sand.u32 %s43, 1
        %s290 = smul.addr %s289, 8
        %s291 = scalar_lea.vmem [#allocation3], %s290
        %p292 = pneg %p56
        %p293 = pneg %p53
        %p294 = pneg %p77
        %p295 = pneg %p74
        %p296 = pneg %p98
        %p297 = pneg %p95
        %p298 = scmp.lt.s32.totalorder %s27, 1
        %s299 = scalar_select %p298, %s27, 1
        %s300 = scalar_lea.vmem %s3, %s299
        %p301 = pneg %p124
        %p302 = pneg %p121
        %s303 = sand.u32 %s23, 1
        %s304 = scalar_lea.sflag [#allocation4], %s303
        %s305 = sand.u32 %s139, 1
        %s306 = smul.addr %s305, 8
        %s307 = scalar_lea.vmem [#allocation8], %s306
        %p308 = pneg %p152
        %p309 = pneg %p149
        %p310 = pneg %p180
        %p311 = pneg %p177
        %s312 = sand.u32 %s167, 1
        %s313 = scalar_lea.sflag [#allocation5], %s312
        %s314 = sand.u32 %s167, 1
        %s315 = smul.addr %s314, 8
        %s316 = scalar_lea.vmem [#allocation9], %s315
        %p317 = scmp.lt.s32.totalorder %s27, 1
        %s318 = scalar_select %p317, %s27, 1
        %s319 = scalar_lea.vmem %s3, %s318
        %p320 = scmp.eq.s32.totalorder %s28, 0
        // Predicated region
        $region53: #{tpu_custom_call.1} parent=39 // pred_check
          %p321 = pneg %p320
        $region54: #{tpu_custom_call.1} parent=39 // pred_check_branch
          %323 = sbr.rel (%p321) target = $region56
        $region55: #{tpu_custom_call.1} parent=39 // pred_region
          %v324 = vld [vmem:[%s269] sm:$0xff]
          %v325 = vld [vmem:[#allocation6] sm:$0xff]
          %v326 = vld [vmem:[#allocation6 + $0x8] sm:$0xff]
          %v327 = vld [vmem:[#allocation6 + $0x10] sm:$0xff]
          %v328 = vld [vmem:[#allocation6 + $0x18] sm:$0xff]
          %v329 = vld [vmem:[%s2] sm:$0x1]
          %v331 = vlaneseq
          %v332 = vshrl.u32 %v331, 7
          %v333 = vsub.s32 0, %v332
          %v334 = vrot.slane %v329, %v333
          %vm336 = vcmask 261120
          %v338 = vsel %vm336, %v324, 0
          %340 = vmatprep.subr.mxu0 0.0
          %341 = vmatpush1.msra.mxu0 0.0
          %342 = vmatprep.subr.mxu0 0.0
          %343 = vmatpush1.msra.mxu0 0.0
          %344 = vmatprep.subr.mxu0 0.0
          %345 = vmatpush1.msra.mxu0 0.0
          %346 = vmatprep.subr.mxu0 0.0
          %347 = vmatpush1.msra.mxu0 0.0
          %348 = vmatprep.subr.mxu0 0.0
          %349 = vmatpush1.msra.mxu0 0.0
          %350 = vmatprep.subr.mxu0 0.0
          %351 = vmatpush1.msra.mxu0 0.0
          %352 = vmatprep.subr.mxu0 0.0
          %353 = vmatpush1.msra.mxu0 0.0
          %354 = vmatprep.subr.mxu0 0.0
          %355 = vmatpush1.msra.mxu0 0.0
          %356 = vmatprep.subr.mxu0 0.0
          %357 = vmatpush1.msra.mxu0 0.0
          %358 = vmatprep.subr.mxu0 0.0
          %359 = vmatpush1.msra.mxu0 0.0
          %360 = vmatprep.subr.mxu0 0.0
          %361 = vmatpush1.msra.mxu0 0.0
          %362 = vmatprep.subr.mxu0 0.0
          %363 = vmatpush1.msra.mxu0 0.0
          %364 = vmatprep.subr.mxu0 0.0
          %365 = vmatpush1.msra.mxu0 %v328
          %366 = vmatprep.subr.mxu0 0.0
          %367 = vmatpush1.msra.mxu0 %v327
          %368 = vmatprep.subr.mxu0 0.0
          %369 = vmatpush1.msra.mxu0 %v326
          %370 = vmatprep.subr.mxu0 0.0
          %371 = vmatpush1.msra.mxu0 %v325
          %372 = vmatprep.subr.mxu0 0.0
          %373 = vmatpush2.msra.mxu0 0.0
          %374 = vmatprep.subr.mxu0 0.0
          %375 = vmatpush2.msra.mxu0 0.0
          %376 = vmatprep.subr.mxu0 0.0
          %377 = vmatpush2.msra.mxu0 0.0
          %378 = vmatprep.subr.mxu0 0.0
          %379 = vmatpush2.msra.mxu0 0.0
          %380 = vmatprep.subr.mxu0 0.0
          %381 = vmatpush2.msra.mxu0 0.0
          %382 = vmatprep.subr.mxu0 0.0
          %383 = vmatpush2.msra.mxu0 0.0
          %384 = vmatprep.subr.mxu0 0.0
          %385 = vmatpush2.msra.mxu0 0.0
          %386 = vmatprep.subr.mxu0 0.0
          %387 = vmatpush2.msra.mxu0 0.0
          %388 = vmatprep.subr.mxu0 0.0
          %389 = vmatpush2.msra.mxu0 0.0
          %390 = vmatprep.subr.mxu0 0.0
          %391 = vmatpush2.msra.mxu0 0.0
          %392 = vmatprep.subr.mxu0 0.0
          %393 = vmatpush2.msra.mxu0 0.0
          %394 = vmatprep.subr.mxu0 0.0
          %395 = vmatpush2.msra.mxu0 0.0
          %396 = vmatprep.subr.mxu0 0.0
          %397 = vmatpush2.msra.mxu0 0.0
          %398 = vmatprep.subr.mxu0 0.0
          %399 = vmatpush2.msra.mxu0 0.0
          %400 = vmatprep.subr.mxu0 0.0
          %401 = vmatpush2.msra.mxu0 0.0
          %402 = vmatprep.subr.mxu0 0.0
          %403 = vmatpush2.msra.mxu0 0.0
          %404 = vmatprep.mubr.f32.mxu0 0.0
          %405 = vmatmul.mubr.f32.gmra.mxu0 %v338
          %v406 = vpop.f32.mrf.mxu0
          %v407 = vadd.f32 %v334, %v406
          %v408 = vpop.f32.mrf.mxu0
          %409 = vdwg.mxu0
          %vm410 = vcmask 785408
          %411 = vst.msk [vmem:[#allocation2] sm:$0xff] %vm410, %v407
        $region56: #{tpu_custom_call.1} parent=39 // pred_fallthru
          _
        %s412 = smul.u32 %s28, 8
        %s413 = scalar_lea.vmem [#allocation2], %s412
        %v414 = vld [vmem:[%s413] sm:$0xff]
        %v415 = vld [vmem:[#allocation2] sm:$0xff]
        %v416 = vld [vmem:[%s319] sm:$0x1]
        %v418 = vlaneseq
        %v419 = vshrl.u32 %v418, 7
        %v420 = vsub.s32 0, %v419
        %v421 = vrot.slane %v416, %v420
        %v423 = vld [vmem:[%s282] sm:$0xff]
        %425 = vrot.lane.b32.xlu0 %v415, 96
        %v426 = vpop.permute.xlu0 %425
        %vm427 = vcmask 64512
        %v429 = vsel %vm427, %v414, 0
        %v431 = vsel %vm427, %v426, 0
        %433 = vmatprep.subr.mxu0 0.0
        %434 = vmatpush1.xpose.msra.mxu0 0.0
        %435 = vmatprep.subr.mxu0 0.0
        %436 = vmatpush1.xpose.msra.mxu0 0.0
        %437 = vmatprep.subr.mxu0 0.0
        %438 = vmatpush1.xpose.msra.mxu0 0.0
        %439 = vmatprep.subr.mxu0 0.0
        %440 = vmatpush1.xpose.msra.mxu0 0.0
        %441 = vmatprep.subr.mxu0 0.0
        %442 = vmatpush1.xpose.msra.mxu0 0.0
        %443 = vmatprep.subr.mxu0 0.0
        %444 = vmatpush1.xpose.msra.mxu0 0.0
        %445 = vmatprep.subr.mxu0 0.0
        %446 = vmatpush1.xpose.msra.mxu0 0.0
        %447 = vmatprep.subr.mxu0 0.0
        %448 = vmatpush1.xpose.msra.mxu0 0.0
        %449 = vmatprep.subr.mxu0 0.0
        %450 = vmatpush1.xpose.msra.mxu0 0.0
        %451 = vmatprep.subr.mxu0 0.0
        %452 = vmatpush1.xpose.msra.mxu0 0.0
        %453 = vmatprep.subr.mxu0 0.0
        %454 = vmatpush1.xpose.msra.mxu0 0.0
        %455 = vmatprep.subr.mxu0 0.0
        %456 = vmatpush1.xpose.msra.mxu0 0.0
        %457 = vmatprep.subr.mxu0 0.0
        %458 = vmatpush1.xpose.msra.mxu0 0.0
        %459 = vmatprep.subr.mxu0 0.0
        %460 = vmatpush1.xpose.msra.mxu0 0.0
        %461 = vmatprep.subr.mxu0 0.0
        %462 = vmatpush1.xpose.msra.mxu0 0.0
        %463 = vmatprep.subr.mxu0 0.0
        %464 = vmatpush1.xpose.msra.mxu0 %v431
        %465 = vmatprep.subr.mxu0 0.0
        %466 = vmatpush2.xpose.msra.mxu0 0.0
        %467 = vmatprep.subr.mxu0 0.0
        %468 = vmatpush2.xpose.msra.mxu0 0.0
        %469 = vmatprep.subr.mxu0 0.0
        %470 = vmatpush2.xpose.msra.mxu0 0.0
        %471 = vmatprep.subr.mxu0 0.0
        %472 = vmatpush2.xpose.msra.mxu0 0.0
        %473 = vmatprep.subr.mxu0 0.0
        %474 = vmatpush2.xpose.msra.mxu0 0.0
        %475 = vmatprep.subr.mxu0 0.0
        %476 = vmatpush2.xpose.msra.mxu0 0.0
        %477 = vmatprep.subr.mxu0 0.0
        %478 = vmatpush2.xpose.msra.mxu0 0.0
        %479 = vmatprep.subr.mxu0 0.0
        %480 = vmatpush2.xpose.msra.mxu0 0.0
        %481 = vmatprep.subr.mxu0 0.0
        %482 = vmatpush2.xpose.msra.mxu0 0.0
        %483 = vmatprep.subr.mxu0 0.0
        %484 = vmatpush2.xpose.msra.mxu0 0.0
        %485 = vmatprep.subr.mxu0 0.0
        %486 = vmatpush2.xpose.msra.mxu0 0.0
        %487 = vmatprep.subr.mxu0 0.0
        %488 = vmatpush2.xpose.msra.mxu0 0.0
        %489 = vmatprep.subr.mxu0 0.0
        %490 = vmatpush2.xpose.msra.mxu0 0.0
        %491 = vmatprep.subr.mxu0 0.0
        %492 = vmatpush2.xpose.msra.mxu0 0.0
        %493 = vmatprep.subr.mxu0 0.0
        %494 = vmatpush2.xpose.msra.mxu0 0.0
        %495 = vmatprep.subr.mxu0 0.0
        %496 = vmatpush2.xpose.msra.mxu0 0.0
        %497 = vmatprep.mubr.f32.mxu0 0.0
        %498 = vmatmul.mubr.f32.gmra.mxu0 %v429
        %v499 = vpop.f32.mrf.mxu0
        %v500 = vadd.f32 %v421, %v499
        %v501 = vpop.f32.mrf.mxu0
        %502 = vdwg.mxu0
        %v503 = vsel %vm427, %v500, -inf
        %504 = vmax.xlane.f32.xlu0 %v503
        %v505 = vpop.xlane.xlu0 %504
        %v506 = vsub.f32 %v500, %v505
        %v507 = vmul.f32 %v506, 1.442695
        %v508 = vpow.pop %v507
        %v509 = vsel %vm427, %v508, 0.0
        %510 = vadd.xlane.f32.xlu0 %v509
        %v511 = vpop.xlane.xlu0 %510
        %v512 = vrcp.pop %v511
        %v513 = vmul.f32 %v508, %v512
        %v514 = vmul.f32 %v513, %v423
        %515 = vrot.lane.b32.xlu0 %v415, 64
        %v516 = vpop.permute.xlu0 %515
        %v519 = vsel %vm427, %v514, 0
        %521 = vmatprep.subr.mxu0 0.0
        %522 = vmatpush1.msra.mxu0 0.0
        %523 = vmatprep.subr.mxu0 0.0
        %524 = vmatpush1.msra.mxu0 0.0
        %525 = vmatprep.subr.mxu0 0.0
        %526 = vmatpush1.msra.mxu0 0.0
        %527 = vmatprep.subr.mxu0 0.0
        %528 = vmatpush1.msra.mxu0 0.0
        %529 = vmatprep.subr.mxu0 0.0
        %530 = vmatpush1.msra.mxu0 0.0
        %531 = vmatprep.subr.mxu0 0.0
        %532 = vmatpush1.msra.mxu0 0.0
        %533 = vmatprep.subr.mxu0 0.0
        %534 = vmatpush1.msra.mxu0 0.0
        %535 = vmatprep.subr.mxu0 0.0
        %536 = vmatpush1.msra.mxu0 0.0
        %537 = vmatprep.subr.mxu0 0.0
        %538 = vmatpush1.msra.mxu0 0.0
        %539 = vmatprep.subr.mxu0 0.0
        %540 = vmatpush1.msra.mxu0 0.0
        %541 = vmatprep.subr.mxu0 0.0
        %542 = vmatpush1.msra.mxu0 0.0
        %543 = vmatprep.subr.mxu0 0.0
        %544 = vmatpush1.msra.mxu0 0.0
        %545 = vmatprep.subr.mxu0 0.0
        %546 = vmatpush1.msra.mxu0 0.0
        %547 = vmatprep.subr.mxu0 0.0
        %548 = vmatpush1.msra.mxu0 0.0
        %549 = vmatprep.subr.mxu0 0.0
        %550 = vmatpush1.msra.mxu0 0.0
        %551 = vmatprep.subr.mxu0 0.0
        %552 = vmatpush1.msra.mxu0 %v516
        %553 = vmatprep.subr.mxu0 0.0
        %554 = vmatpush2.msra.mxu0 0.0
        %555 = vmatprep.subr.mxu0 0.0
        %556 = vmatpush2.msra.mxu0 0.0
        %557 = vmatprep.subr.mxu0 0.0
        %558 = vmatpush2.msra.mxu0 0.0
        %559 = vmatprep.subr.mxu0 0.0
        %560 = vmatpush2.msra.mxu0 0.0
        %561 = vmatprep.subr.mxu0 0.0
        %562 = vmatpush2.msra.mxu0 0.0
        %563 = vmatprep.subr.mxu0 0.0
        %564 = vmatpush2.msra.mxu0 0.0
        %565 = vmatprep.subr.mxu0 0.0
        %566 = vmatpush2.msra.mxu0 0.0
        %567 = vmatprep.subr.mxu0 0.0
        %568 = vmatpush2.msra.mxu0 0.0
        %569 = vmatprep.subr.mxu0 0.0
        %570 = vmatpush2.msra.mxu0 0.0
        %571 = vmatprep.subr.mxu0 0.0
        %572 = vmatpush2.msra.mxu0 0.0
        %573 = vmatprep.subr.mxu0 0.0
        %574 = vmatpush2.msra.mxu0 0.0
        %575 = vmatprep.subr.mxu0 0.0
        %576 = vmatpush2.msra.mxu0 0.0
        %577 = vmatprep.subr.mxu0 0.0
        %578 = vmatpush2.msra.mxu0 0.0
        %579 = vmatprep.subr.mxu0 0.0
        %580 = vmatpush2.msra.mxu0 0.0
        %581 = vmatprep.subr.mxu0 0.0
        %582 = vmatpush2.msra.mxu0 0.0
        %583 = vmatprep.subr.mxu0 0.0
        %584 = vmatpush2.msra.mxu0 0.0
        %585 = vmatprep.mubr.f32.mxu0 0.0
        %586 = vmatmul.mubr.f32.gmra.mxu0 %v519
        %v587 = vpop.f32.mrf.mxu0
        %v588 = vadd.f32 0.0, %v587
        %v589 = vpop.f32.mrf.mxu0
        %590 = vdwg.mxu0
        %591 = vrot.lane.b32.xlu0 %v414, 120
        %v592 = vpop.permute.xlu0 %591
        %593 = vrot.lane.b32.xlu0 %v415, 88
        %v594 = vpop.permute.xlu0 %593
        %v595 = vsel %vm427, %v592, 0
        %v597 = vsel %vm427, %v594, 0
        %599 = vmatprep.subr.mxu0 0.0
        %600 = vmatpush1.xpose.msra.mxu0 0.0
        %601 = vmatprep.subr.mxu0 0.0
        %602 = vmatpush1.xpose.msra.mxu0 0.0
        %603 = vmatprep.subr.mxu0 0.0
        %604 = vmatpush1.xpose.msra.mxu0 0.0
        %605 = vmatprep.subr.mxu0 0.0
        %606 = vmatpush1.xpose.msra.mxu0 0.0
        %607 = vmatprep.subr.mxu0 0.0
        %608 = vmatpush1.xpose.msra.mxu0 0.0
        %609 = vmatprep.subr.mxu0 0.0
        %610 = vmatpush1.xpose.msra.mxu0 0.0
        %611 = vmatprep.subr.mxu0 0.0
        %612 = vmatpush1.xpose.msra.mxu0 0.0
        %613 = vmatprep.subr.mxu0 0.0
        %614 = vmatpush1.xpose.msra.mxu0 0.0
        %615 = vmatprep.subr.mxu0 0.0
        %616 = vmatpush1.xpose.msra.mxu0 0.0
        %617 = vmatprep.subr.mxu0 0.0
        %618 = vmatpush1.xpose.msra.mxu0 0.0
        %619 = vmatprep.subr.mxu0 0.0
        %620 = vmatpush1.xpose.msra.mxu0 0.0
        %621 = vmatprep.subr.mxu0 0.0
        %622 = vmatpush1.xpose.msra.mxu0 0.0
        %623 = vmatprep.subr.mxu0 0.0
        %624 = vmatpush1.xpose.msra.mxu0 0.0
        %625 = vmatprep.subr.mxu0 0.0
        %626 = vmatpush1.xpose.msra.mxu0 0.0
        %627 = vmatprep.subr.mxu0 0.0
        %628 = vmatpush1.xpose.msra.mxu0 0.0
        %629 = vmatprep.subr.mxu0 0.0
        %630 = vmatpush1.xpose.msra.mxu0 %v597
        %631 = vmatprep.subr.mxu0 0.0
        %632 = vmatpush2.xpose.msra.mxu0 0.0
        %633 = vmatprep.subr.mxu0 0.0
        %634 = vmatpush2.xpose.msra.mxu0 0.0
        %635 = vmatprep.subr.mxu0 0.0
        %636 = vmatpush2.xpose.msra.mxu0 0.0
        %637 = vmatprep.subr.mxu0 0.0
        %638 = vmatpush2.xpose.msra.mxu0 0.0
        %639 = vmatprep.subr.mxu0 0.0
        %640 = vmatpush2.xpose.msra.mxu0 0.0
        %641 = vmatprep.subr.mxu0 0.0
        %642 = vmatpush2.xpose.msra.mxu0 0.0
        %643 = vmatprep.subr.mxu0 0.0
        %644 = vmatpush2.xpose.msra.mxu0 0.0
        %645 = vmatprep.subr.mxu0 0.0
        %646 = vmatpush2.xpose.msra.mxu0 0.0
        %647 = vmatprep.subr.mxu0 0.0
        %648 = vmatpush2.xpose.msra.mxu0 0.0
        %649 = vmatprep.subr.mxu0 0.0
        %650 = vmatpush2.xpose.msra.mxu0 0.0
        %651 = vmatprep.subr.mxu0 0.0
        %652 = vmatpush2.xpose.msra.mxu0 0.0
        %653 = vmatprep.subr.mxu0 0.0
        %654 = vmatpush2.xpose.msra.mxu0 0.0
        %655 = vmatprep.subr.mxu0 0.0
        %656 = vmatpush2.xpose.msra.mxu0 0.0
        %657 = vmatprep.subr.mxu0 0.0
        %658 = vmatpush2.xpose.msra.mxu0 0.0
        %659 = vmatprep.subr.mxu0 0.0
        %660 = vmatpush2.xpose.msra.mxu0 0.0
        %661 = vmatprep.subr.mxu0 0.0
        %662 = vmatpush2.xpose.msra.mxu0 0.0
        %663 = vmatprep.mubr.f32.mxu0 0.0
        %664 = vmatmul.mubr.f32.gmra.mxu0 %v595
        %v665 = vpop.f32.mrf.mxu0
        %v666 = vadd.f32 %v421, %v665
        %v667 = vpop.f32.mrf.mxu0
        %668 = vdwg.mxu0
        %v669 = vsel %vm427, %v666, -inf
        %670 = vmax.xlane.f32.xlu0 %v669
        %v671 = vpop.xlane.xlu0 %670
        %v672 = vsub.f32 %v666, %v671
        %v673 = vmul.f32 %v672, 1.442695
        %v674 = vpow.pop %v673
        %v675 = vsel %vm427, %v674, 0.0
        %676 = vadd.xlane.f32.xlu0 %v675
        %v677 = vpop.xlane.xlu0 %676
        %v678 = vrcp.pop %v677
        %v679 = vmul.f32 %v674, %v678
        %v680 = vmul.f32 %v679, %v423
        %681 = vrot.lane.b32.xlu0 %v415, 56
        %v682 = vpop.permute.xlu0 %681
        %v685 = vsel %vm427, %v680, 0
        %687 = vmatprep.subr.mxu0 0.0
        %688 = vmatpush1.msra.mxu0 0.0
        %689 = vmatprep.subr.mxu0 0.0
        %690 = vmatpush1.msra.mxu0 0.0
        %691 = vmatprep.subr.mxu0 0.0
        %692 = vmatpush1.msra.mxu0 0.0
        %693 = vmatprep.subr.mxu0 0.0
        %694 = vmatpush1.msra.mxu0 0.0
        %695 = vmatprep.subr.mxu0 0.0
        %696 = vmatpush1.msra.mxu0 0.0
        %697 = vmatprep.subr.mxu0 0.0
        %698 = vmatpush1.msra.mxu0 0.0
        %699 = vmatprep.subr.mxu0 0.0
        %700 = vmatpush1.msra.mxu0 0.0
        %701 = vmatprep.subr.mxu0 0.0
        %702 = vmatpush1.msra.mxu0 0.0
        %703 = vmatprep.subr.mxu0 0.0
        %704 = vmatpush1.msra.mxu0 0.0
        %705 = vmatprep.subr.mxu0 0.0
        %706 = vmatpush1.msra.mxu0 0.0
        %707 = vmatprep.subr.mxu0 0.0
        %708 = vmatpush1.msra.mxu0 0.0
        %709 = vmatprep.subr.mxu0 0.0
        %710 = vmatpush1.msra.mxu0 0.0
        %711 = vmatprep.subr.mxu0 0.0
        %712 = vmatpush1.msra.mxu0 0.0
        %713 = vmatprep.subr.mxu0 0.0
        %714 = vmatpush1.msra.mxu0 0.0
        %715 = vmatprep.subr.mxu0 0.0
        %716 = vmatpush1.msra.mxu0 0.0
        %717 = vmatprep.subr.mxu0 0.0
        %718 = vmatpush1.msra.mxu0 %v682
        %719 = vmatprep.subr.mxu0 0.0
        %720 = vmatpush2.msra.mxu0 0.0
        %721 = vmatprep.subr.mxu0 0.0
        %722 = vmatpush2.msra.mxu0 0.0
        %723 = vmatprep.subr.mxu0 0.0
        %724 = vmatpush2.msra.mxu0 0.0
        %725 = vmatprep.subr.mxu0 0.0
        %726 = vmatpush2.msra.mxu0 0.0
        %727 = vmatprep.subr.mxu0 0.0
        %728 = vmatpush2.msra.mxu0 0.0
        %729 = vmatprep.subr.mxu0 0.0
        %730 = vmatpush2.msra.mxu0 0.0
        %731 = vmatprep.subr.mxu0 0.0
        %732 = vmatpush2.msra.mxu0 0.0
        %733 = vmatprep.subr.mxu0 0.0
        %734 = vmatpush2.msra.mxu0 0.0
        %735 = vmatprep.subr.mxu0 0.0
        %736 = vmatpush2.msra.mxu0 0.0
        %737 = vmatprep.subr.mxu0 0.0
        %738 = vmatpush2.msra.mxu0 0.0
        %739 = vmatprep.subr.mxu0 0.0
        %740 = vmatpush2.msra.mxu0 0.0
        %741 = vmatprep.subr.mxu0 0.0
        %742 = vmatpush2.msra.mxu0 0.0
        %743 = vmatprep.subr.mxu0 0.0
        %744 = vmatpush2.msra.mxu0 0.0
        %745 = vmatprep.subr.mxu0 0.0
        %746 = vmatpush2.msra.mxu0 0.0
        %747 = vmatprep.subr.mxu0 0.0
        %748 = vmatpush2.msra.mxu0 0.0
        %749 = vmatprep.subr.mxu0 0.0
        %750 = vmatpush2.msra.mxu0 0.0
        %751 = vmatprep.mubr.f32.mxu0 0.0
        %752 = vmatmul.mubr.f32.gmra.mxu0 %v685
        %v753 = vpop.f32.mrf.mxu0
        %v754 = vadd.f32 0.0, %v753
        %v755 = vpop.f32.mrf.mxu0
        %756 = vdwg.mxu0
        %757 = vrot.lane.b32.xlu0 %v414, 112
        %v758 = vpop.permute.xlu0 %757
        %759 = vrot.lane.b32.xlu0 %v415, 80
        %v760 = vpop.permute.xlu0 %759
        %v761 = vsel %vm427, %v758, 0
        %v763 = vsel %vm427, %v760, 0
        %765 = vmatprep.subr.mxu0 0.0
        %766 = vmatpush1.xpose.msra.mxu0 0.0
        %767 = vmatprep.subr.mxu0 0.0
        %768 = vmatpush1.xpose.msra.mxu0 0.0
        %769 = vmatprep.subr.mxu0 0.0
        %770 = vmatpush1.xpose.msra.mxu0 0.0
        %771 = vmatprep.subr.mxu0 0.0
        %772 = vmatpush1.xpose.msra.mxu0 0.0
        %773 = vmatprep.subr.mxu0 0.0
        %774 = vmatpush1.xpose.msra.mxu0 0.0
        %775 = vmatprep.subr.mxu0 0.0
        %776 = vmatpush1.xpose.msra.mxu0 0.0
        %777 = vmatprep.subr.mxu0 0.0
        %778 = vmatpush1.xpose.msra.mxu0 0.0
        %779 = vmatprep.subr.mxu0 0.0
        %780 = vmatpush1.xpose.msra.mxu0 0.0
        %781 = vmatprep.subr.mxu0 0.0
        %782 = vmatpush1.xpose.msra.mxu0 0.0
        %783 = vmatprep.subr.mxu0 0.0
        %784 = vmatpush1.xpose.msra.mxu0 0.0
        %785 = vmatprep.subr.mxu0 0.0
        %786 = vmatpush1.xpose.msra.mxu0 0.0
        %787 = vmatprep.subr.mxu0 0.0
        %788 = vmatpush1.xpose.msra.mxu0 0.0
        %789 = vmatprep.subr.mxu0 0.0
        %790 = vmatpush1.xpose.msra.mxu0 0.0
        %791 = vmatprep.subr.mxu0 0.0
        %792 = vmatpush1.xpose.msra.mxu0 0.0
        %793 = vmatprep.subr.mxu0 0.0
        %794 = vmatpush1.xpose.msra.mxu0 0.0
        %795 = vmatprep.subr.mxu0 0.0
        %796 = vmatpush1.xpose.msra.mxu0 %v763
        %797 = vmatprep.subr.mxu0 0.0
        %798 = vmatpush2.xpose.msra.mxu0 0.0
        %799 = vmatprep.subr.mxu0 0.0
        %800 = vmatpush2.xpose.msra.mxu0 0.0
        %801 = vmatprep.subr.mxu0 0.0
        %802 = vmatpush2.xpose.msra.mxu0 0.0
        %803 = vmatprep.subr.mxu0 0.0
        %804 = vmatpush2.xpose.msra.mxu0 0.0
        %805 = vmatprep.subr.mxu0 0.0
        %806 = vmatpush2.xpose.msra.mxu0 0.0
        %807 = vmatprep.subr.mxu0 0.0
        %808 = vmatpush2.xpose.msra.mxu0 0.0
        %809 = vmatprep.subr.mxu0 0.0
        %810 = vmatpush2.xpose.msra.mxu0 0.0
        %811 = vmatprep.subr.mxu0 0.0
        %812 = vmatpush2.xpose.msra.mxu0 0.0
        %813 = vmatprep.subr.mxu0 0.0
        %814 = vmatpush2.xpose.msra.mxu0 0.0
        %815 = vmatprep.subr.mxu0 0.0
        %816 = vmatpush2.xpose.msra.mxu0 0.0
        %817 = vmatprep.subr.mxu0 0.0
        %818 = vmatpush2.xpose.msra.mxu0 0.0
        %819 = vmatprep.subr.mxu0 0.0
        %820 = vmatpush2.xpose.msra.mxu0 0.0
        %821 = vmatprep.subr.mxu0 0.0
        %822 = vmatpush2.xpose.msra.mxu0 0.0
        %823 = vmatprep.subr.mxu0 0.0
        %824 = vmatpush2.xpose.msra.mxu0 0.0
        %825 = vmatprep.subr.mxu0 0.0
        %826 = vmatpush2.xpose.msra.mxu0 0.0
        %827 = vmatprep.subr.mxu0 0.0
        %828 = vmatpush2.xpose.msra.mxu0 0.0
        %829 = vmatprep.mubr.f32.mxu0 0.0
        %830 = vmatmul.mubr.f32.gmra.mxu0 %v761
        %v831 = vpop.f32.mrf.mxu0
        %v832 = vadd.f32 %v421, %v831
        %v833 = vpop.f32.mrf.mxu0
        %834 = vdwg.mxu0
        %v835 = vsel %vm427, %v832, -inf
        %836 = vmax.xlane.f32.xlu0 %v835
        %v837 = vpop.xlane.xlu0 %836
        %v838 = vsub.f32 %v832, %v837
        %v839 = vmul.f32 %v838, 1.442695
        %v840 = vpow.pop %v839
        %v841 = vsel %vm427, %v840, 0.0
        %842 = vadd.xlane.f32.xlu0 %v841
        %v843 = vpop.xlane.xlu0 %842
        %v844 = vrcp.pop %v843
        %v845 = vmul.f32 %v840, %v844
        %v846 = vmul.f32 %v845, %v423
        %847 = vrot.lane.b32.xlu0 %v415, 48
        %v848 = vpop.permute.xlu0 %847
        %v851 = vsel %vm427, %v846, 0
        %853 = vmatprep.subr.mxu0 0.0
        %854 = vmatpush1.msra.mxu0 0.0
        %855 = vmatprep.subr.mxu0 0.0
        %856 = vmatpush1.msra.mxu0 0.0
        %857 = vmatprep.subr.mxu0 0.0
        %858 = vmatpush1.msra.mxu0 0.0
        %859 = vmatprep.subr.mxu0 0.0
        %860 = vmatpush1.msra.mxu0 0.0
        %861 = vmatprep.subr.mxu0 0.0
        %862 = vmatpush1.msra.mxu0 0.0
        %863 = vmatprep.subr.mxu0 0.0
        %864 = vmatpush1.msra.mxu0 0.0
        %865 = vmatprep.subr.mxu0 0.0
        %866 = vmatpush1.msra.mxu0 0.0
        %867 = vmatprep.subr.mxu0 0.0
        %868 = vmatpush1.msra.mxu0 0.0
        %869 = vmatprep.subr.mxu0 0.0
        %870 = vmatpush1.msra.mxu0 0.0
        %871 = vmatprep.subr.mxu0 0.0
        %872 = vmatpush1.msra.mxu0 0.0
        %873 = vmatprep.subr.mxu0 0.0
        %874 = vmatpush1.msra.mxu0 0.0
        %875 = vmatprep.subr.mxu0 0.0
        %876 = vmatpush1.msra.mxu0 0.0
        %877 = vmatprep.subr.mxu0 0.0
        %878 = vmatpush1.msra.mxu0 0.0
        %879 = vmatprep.subr.mxu0 0.0
        %880 = vmatpush1.msra.mxu0 0.0
        %881 = vmatprep.subr.mxu0 0.0
        %882 = vmatpush1.msra.mxu0 0.0
        %883 = vmatprep.subr.mxu0 0.0
        %884 = vmatpush1.msra.mxu0 %v848
        %885 = vmatprep.subr.mxu0 0.0
        %886 = vmatpush2.msra.mxu0 0.0
        %887 = vmatprep.subr.mxu0 0.0
        %888 = vmatpush2.msra.mxu0 0.0
        %889 = vmatprep.subr.mxu0 0.0
        %890 = vmatpush2.msra.mxu0 0.0
        %891 = vmatprep.subr.mxu0 0.0
        %892 = vmatpush2.msra.mxu0 0.0
        %893 = vmatprep.subr.mxu0 0.0
        %894 = vmatpush2.msra.mxu0 0.0
        %895 = vmatprep.subr.mxu0 0.0
        %896 = vmatpush2.msra.mxu0 0.0
        %897 = vmatprep.subr.mxu0 0.0
        %898 = vmatpush2.msra.mxu0 0.0
        %899 = vmatprep.subr.mxu0 0.0
        %900 = vmatpush2.msra.mxu0 0.0
        %901 = vmatprep.subr.mxu0 0.0
        %902 = vmatpush2.msra.mxu0 0.0
        %903 = vmatprep.subr.mxu0 0.0
        %904 = vmatpush2.msra.mxu0 0.0
        %905 = vmatprep.subr.mxu0 0.0
        %906 = vmatpush2.msra.mxu0 0.0
        %907 = vmatprep.subr.mxu0 0.0
        %908 = vmatpush2.msra.mxu0 0.0
        %909 = vmatprep.subr.mxu0 0.0
        %910 = vmatpush2.msra.mxu0 0.0
        %911 = vmatprep.subr.mxu0 0.0
        %912 = vmatpush2.msra.mxu0 0.0
        %913 = vmatprep.subr.mxu0 0.0
        %914 = vmatpush2.msra.mxu0 0.0
        %915 = vmatprep.subr.mxu0 0.0
        %916 = vmatpush2.msra.mxu0 0.0
        %917 = vmatprep.mubr.f32.mxu0 0.0
        %918 = vmatmul.mubr.f32.gmra.mxu0 %v851
        %v919 = vpop.f32.mrf.mxu0
        %v920 = vadd.f32 0.0, %v919
        %v921 = vpop.f32.mrf.mxu0
        %922 = vdwg.mxu0
        %923 = vrot.lane.b32.xlu0 %v414, 104
        %v924 = vpop.permute.xlu0 %923
        %925 = vrot.lane.b32.xlu0 %v415, 72
        %v926 = vpop.permute.xlu0 %925
        %v927 = vsel %vm427, %v924, 0
        %v929 = vsel %vm427, %v926, 0
        %931 = vmatprep.subr.mxu0 0.0
        %932 = vmatpush1.xpose.msra.mxu0 0.0
        %933 = vmatprep.subr.mxu0 0.0
        %934 = vmatpush1.xpose.msra.mxu0 0.0
        %935 = vmatprep.subr.mxu0 0.0
        %936 = vmatpush1.xpose.msra.mxu0 0.0
        %937 = vmatprep.subr.mxu0 0.0
        %938 = vmatpush1.xpose.msra.mxu0 0.0
        %939 = vmatprep.subr.mxu0 0.0
        %940 = vmatpush1.xpose.msra.mxu0 0.0
        %941 = vmatprep.subr.mxu0 0.0
        %942 = vmatpush1.xpose.msra.mxu0 0.0
        %943 = vmatprep.subr.mxu0 0.0
        %944 = vmatpush1.xpose.msra.mxu0 0.0
        %945 = vmatprep.subr.mxu0 0.0
        %946 = vmatpush1.xpose.msra.mxu0 0.0
        %947 = vmatprep.subr.mxu0 0.0
        %948 = vmatpush1.xpose.msra.mxu0 0.0
        %949 = vmatprep.subr.mxu0 0.0
        %950 = vmatpush1.xpose.msra.mxu0 0.0
        %951 = vmatprep.subr.mxu0 0.0
        %952 = vmatpush1.xpose.msra.mxu0 0.0
        %953 = vmatprep.subr.mxu0 0.0
        %954 = vmatpush1.xpose.msra.mxu0 0.0
        %955 = vmatprep.subr.mxu0 0.0
        %956 = vmatpush1.xpose.msra.mxu0 0.0
        %957 = vmatprep.subr.mxu0 0.0
        %958 = vmatpush1.xpose.msra.mxu0 0.0
        %959 = vmatprep.subr.mxu0 0.0
        %960 = vmatpush1.xpose.msra.mxu0 0.0
        %961 = vmatprep.subr.mxu0 0.0
        %962 = vmatpush1.xpose.msra.mxu0 %v929
        %963 = vmatprep.subr.mxu0 0.0
        %964 = vmatpush2.xpose.msra.mxu0 0.0
        %965 = vmatprep.subr.mxu0 0.0
        %966 = vmatpush2.xpose.msra.mxu0 0.0
        %967 = vmatprep.subr.mxu0 0.0
        %968 = vmatpush2.xpose.msra.mxu0 0.0
        %969 = vmatprep.subr.mxu0 0.0
        %970 = vmatpush2.xpose.msra.mxu0 0.0
        %971 = vmatprep.subr.mxu0 0.0
        %972 = vmatpush2.xpose.msra.mxu0 0.0
        %973 = vmatprep.subr.mxu0 0.0
        %974 = vmatpush2.xpose.msra.mxu0 0.0
        %975 = vmatprep.subr.mxu0 0.0
        %976 = vmatpush2.xpose.msra.mxu0 0.0
        %977 = vmatprep.subr.mxu0 0.0
        %978 = vmatpush2.xpose.msra.mxu0 0.0
        %979 = vmatprep.subr.mxu0 0.0
        %980 = vmatpush2.xpose.msra.mxu0 0.0
        %981 = vmatprep.subr.mxu0 0.0
        %982 = vmatpush2.xpose.msra.mxu0 0.0
        %983 = vmatprep.subr.mxu0 0.0
        %984 = vmatpush2.xpose.msra.mxu0 0.0
        %985 = vmatprep.subr.mxu0 0.0
        %986 = vmatpush2.xpose.msra.mxu0 0.0
        %987 = vmatprep.subr.mxu0 0.0
        %988 = vmatpush2.xpose.msra.mxu0 0.0
        %989 = vmatprep.subr.mxu0 0.0
        %990 = vmatpush2.xpose.msra.mxu0 0.0
        %991 = vmatprep.subr.mxu0 0.0
        %992 = vmatpush2.xpose.msra.mxu0 0.0
        %993 = vmatprep.subr.mxu0 0.0
        %994 = vmatpush2.xpose.msra.mxu0 0.0
        %995 = vmatprep.mubr.f32.mxu0 0.0
        %996 = vmatmul.mubr.f32.gmra.mxu0 %v927
        %v997 = vpop.f32.mrf.mxu0
        %v998 = vadd.f32 %v421, %v997
        %v999 = vpop.f32.mrf.mxu0
        %1000 = vdwg.mxu0
        %v1001 = vsel %vm427, %v998, -inf
        %1002 = vmax.xlane.f32.xlu0 %v1001
        %v1003 = vpop.xlane.xlu0 %1002
        %v1004 = vsub.f32 %v998, %v1003
        %v1005 = vmul.f32 %v1004, 1.442695
        %v1006 = vpow.pop %v1005
        %v1007 = vsel %vm427, %v1006, 0.0
        %1008 = vadd.xlane.f32.xlu0 %v1007
        %v1009 = vpop.xlane.xlu0 %1008
        %v1010 = vrcp.pop %v1009
        %v1011 = vmul.f32 %v1006, %v1010
        %v1012 = vmul.f32 %v1011, %v423
        %1013 = vrot.lane.b32.xlu0 %v415, 40
        %v1014 = vpop.permute.xlu0 %1013
        %v1017 = vsel %vm427, %v1012, 0
        %1019 = vmatprep.subr.mxu0 0.0
        %1020 = vmatpush1.msra.mxu0 0.0
        %1021 = vmatprep.subr.mxu0 0.0
        %1022 = vmatpush1.msra.mxu0 0.0
        %1023 = vmatprep.subr.mxu0 0.0
        %1024 = vmatpush1.msra.mxu0 0.0
        %1025 = vmatprep.subr.mxu0 0.0
        %1026 = vmatpush1.msra.mxu0 0.0
        %1027 = vmatprep.subr.mxu0 0.0
        %1028 = vmatpush1.msra.mxu0 0.0
        %1029 = vmatprep.subr.mxu0 0.0
        %1030 = vmatpush1.msra.mxu0 0.0
        %1031 = vmatprep.subr.mxu0 0.0
        %1032 = vmatpush1.msra.mxu0 0.0
        %1033 = vmatprep.subr.mxu0 0.0
        %1034 = vmatpush1.msra.mxu0 0.0
        %1035 = vmatprep.subr.mxu0 0.0
        %1036 = vmatpush1.msra.mxu0 0.0
        %1037 = vmatprep.subr.mxu0 0.0
        %1038 = vmatpush1.msra.mxu0 0.0
        %1039 = vmatprep.subr.mxu0 0.0
        %1040 = vmatpush1.msra.mxu0 0.0
        %1041 = vmatprep.subr.mxu0 0.0
        %1042 = vmatpush1.msra.mxu0 0.0
        %1043 = vmatprep.subr.mxu0 0.0
        %1044 = vmatpush1.msra.mxu0 0.0
        %1045 = vmatprep.subr.mxu0 0.0
        %1046 = vmatpush1.msra.mxu0 0.0
        %1047 = vmatprep.subr.mxu0 0.0
        %1048 = vmatpush1.msra.mxu0 0.0
        %1049 = vmatprep.subr.mxu0 0.0
        %1050 = vmatpush1.msra.mxu0 %v1014
        %1051 = vmatprep.subr.mxu0 0.0
        %1052 = vmatpush2.msra.mxu0 0.0
        %1053 = vmatprep.subr.mxu0 0.0
        %1054 = vmatpush2.msra.mxu0 0.0
        %1055 = vmatprep.subr.mxu0 0.0
        %1056 = vmatpush2.msra.mxu0 0.0
        %1057 = vmatprep.subr.mxu0 0.0
        %1058 = vmatpush2.msra.mxu0 0.0
        %1059 = vmatprep.subr.mxu0 0.0
        %1060 = vmatpush2.msra.mxu0 0.0
        %1061 = vmatprep.subr.mxu0 0.0
        %1062 = vmatpush2.msra.mxu0 0.0
        %1063 = vmatprep.subr.mxu0 0.0
        %1064 = vmatpush2.msra.mxu0 0.0
        %1065 = vmatprep.subr.mxu0 0.0
        %1066 = vmatpush2.msra.mxu0 0.0
        %1067 = vmatprep.subr.mxu0 0.0
        %1068 = vmatpush2.msra.mxu0 0.0
        %1069 = vmatprep.subr.mxu0 0.0
        %1070 = vmatpush2.msra.mxu0 0.0
        %1071 = vmatprep.subr.mxu0 0.0
        %1072 = vmatpush2.msra.mxu0 0.0
        %1073 = vmatprep.subr.mxu0 0.0
        %1074 = vmatpush2.msra.mxu0 0.0
        %1075 = vmatprep.subr.mxu0 0.0
        %1076 = vmatpush2.msra.mxu0 0.0
        %1077 = vmatprep.subr.mxu0 0.0
        %1078 = vmatpush2.msra.mxu0 0.0
        %1079 = vmatprep.subr.mxu0 0.0
        %1080 = vmatpush2.msra.mxu0 0.0
        %1081 = vmatprep.subr.mxu0 0.0
        %1082 = vmatpush2.msra.mxu0 0.0
        %1083 = vmatprep.mubr.f32.mxu0 0.0
        %1084 = vmatmul.mubr.f32.gmra.mxu0 %v1017
        %v1085 = vpop.f32.mrf.mxu0
        %v1086 = vadd.f32 0.0, %v1085
        %v1087 = vpop.f32.mrf.mxu0
        %1088 = vdwg.mxu0
        %1090 = vrot.lane.b32.xlu0 %v754, 8
        %v1091 = vpop.permute.xlu0 %1090
        %1094 = vrot.lane.b32.xlu0 %v920, 16
        %v1095 = vpop.permute.xlu0 %1094
        %1098 = vrot.lane.b32.xlu0 %v1086, 24
        %v1099 = vpop.permute.xlu0 %1098
        %v1101 = vsel %vm427, %v588, %v1091
        %vm1102 = vcmask 130048
        %v1103 = vsel %vm1102, %v1101, %v1095
        %vm1104 = vcmask 195584
        %v1105 = vsel %vm1104, %v1103, %v1099
        %vm1106 = vcmask 261120
        %1107 = vst.msk [vmem:[%s316] sm:$0xff] %vm1106, %v1105
        %s1108 = sand.u32 %s167, 1
        %s1109 = scalar_lea.sflag [#allocation5], %s1108
        %s1110 = sand.u32 %s167, 1
        %s1111 = smul.addr %s1110, 8
        %s1112 = scalar_lea.vmem [#allocation9], %s1111
        // Predicated region
        $region57: #{tpu_custom_call.1} parent=39 // pred_check
          %p1113 = pneg %p177
        $region58: #{tpu_custom_call.1} parent=39 // pred_check_branch
          %1115 = sbr.rel (%p1113) target = $region60
        $region59: #{tpu_custom_call.1} parent=39 // pred_region
          %s1117 = ssub.s32 128, 128
          %1118 = vsyncadd %s1109, %s1117
          %s1119 = sadd.s32 %s28, %s27
          %s1120 = smul.addr %s1119, 128
          %s1121 = scalar_lea.hbm %s5, %s1120
          %s1123 = sshll.u32 %s1112, 4
          %s1124 = int_to_ptr.vmem [resolvable:$true] %s1123
          %1126 = dma.vmem_to_hbm [thread:$0]  %s1124, 128, %s1121, %s1109
        $region60: #{tpu_custom_call.1} parent=39 // pred_fallthru
          _
      $region40: #{tpu_custom_call.1} parent=5 // pred_fallthru
        _
      %p1127 = scmp.le.s32.totalorder 2, %s18
      // Predicated region
      $region61: #{tpu_custom_call.1} parent=5 // pred_check
        %p1128 = pneg %p1127
      $region62: #{tpu_custom_call.1} parent=5 // pred_check_branch
        %1130 = sbr.rel (%p1128) target = $region64
      $region63: #{tpu_custom_call.1} parent=5 // pred_region
        %s1131 = ssub.s32 %s18, 2
        // Predicated region
        $region65: #{tpu_custom_call.1} parent=63 // pred_check
          %p1132 = pneg %p183
        $region66: #{tpu_custom_call.1} parent=63 // pred_check_branch
          %1134 = sbr.rel (%p1132) target = $region68
        $region67: #{tpu_custom_call.1} parent=63 // pred_region
          %s1135 = sand.u32 %s168, 1
          %s1136 = scalar_lea.sflag [#allocation5], %s1135
          %s1137 = sand.u32 %s168, 1
          %s1138 = smul.addr %s1137, 8
          %s1139 = scalar_lea.vmem [#allocation9], %s1138
          %1140 = dma.done %s1136, 128
        $region68: #{tpu_custom_call.1} parent=63 // pred_fallthru
          _
      $region64: #{tpu_custom_call.1} parent=5 // pred_fallthru
        _
    $region6: #{tpu_custom_call.1} parent=1 // loop_footer
      %s22 = sadd.s32 1, %s18
    $region7: #{tpu_custom_call.1} parent=1 // loop_footer_branch
      %17 = sbr.rel target = $region3
    $region8: #{tpu_custom_call.1} parent=1 // loop_exit
      _
    %1141 = vsyncpa [#allocation4], 1
    %s1142 = scalar_lea.sflag [#allocation4], 1
    %1143 = vsyncpa %s1142, 1
    %1144 = vsyncpa [#allocation7], 1
    %1145 = vsyncpa [#allocation5], 1
    %s1146 = scalar_lea.sflag [#allocation5], 1
    %1147 = vsyncpa %s1146, 1

</llo_original>
